<compile_context>
chip_gen: v5e
topology: v5e:2x2
jax: 0.10.0
libtpu: 0.0.40
codegen_flags: <defaults>
</compile_context>

<pallas_src>
import functools

import jax
import jax.numpy as jnp
import numpy as np
from jax.experimental import pallas as pl
from jax.experimental.pallas import tpu as pltpu

_LANES = 128


def _conv_stats_kernel(x_ref, w_ref, conv_ref, stats_ref, *, stride):
    # x_ref:     (1, Hp, Wp, Cin)   padded NHWC input for one image (VMEM)
    # w_ref:     (9*Cin, 128)       conv weight, rows ordered (kh, kw, Cin),
    #                               one 128-wide Cout block (zero-padded columns)
    # conv_ref:  (1, Ho, Wo, 128)   f32 conv output (lane-dense)
    # stats_ref: (1, 1, 2, 128)     per-tile [sum, sum_of_squares] over pixels
    _, Hp, Wp, Cin = x_ref.shape
    _, Ho, Wo, Cpb = conv_ref.shape

    xs = x_ref[0].astype(jnp.float32)                                 # (Hp, Wp, Cin)

    # im2col: gather the 9 taps once, then ONE MXU matmul with K = 9*Cin.
    cols = []
    for kh in range(3):
        row = xs[kh:kh + (Ho - 1) * stride + 1:stride, :, :]          # (Ho, Wp, Cin)
        for kw in range(3):
            win = row[:, kw:kw + (Wo - 1) * stride + 1:stride, :]     # (Ho, Wo, Cin)
            cols.append(win.reshape(Ho * Wo, Cin))
    patch = jnp.concatenate(cols, axis=-1)                            # (Ho*Wo, 9*Cin)

    acc = jnp.dot(patch, w_ref[...],
                  preferred_element_type=jnp.float32)                 # (Ho*Wo, 128)

    conv_ref[...] = acc.reshape(1, Ho, Wo, Cpb)

    # Partial BatchNorm statistics for this tile; reduced across tiles in the
    # wrapper so batch mean/var stay globally correct under tiling.
    ssum = jnp.sum(acc, axis=0, keepdims=True)                        # (1, 128)
    ssq = jnp.sum(acc * acc, axis=0, keepdims=True)                   # (1, 128)
    stats_ref[...] = jnp.concatenate([ssum, ssq], axis=0).reshape(1, 1, 2, Cpb)


def _bn_relu_kernel(conv_ref, ss_ref, o_ref):
    # conv_ref: (1, Ho, Wo, 128) f32 conv activations
    # ss_ref:   (1, 2, 128)      row 0: gamma*inv_std, row 1: beta - mean*scale
    # o_ref:    (1, Ho, Wo, 128) final output block (lane-dense)
    Cpb = o_ref.shape[-1]
    ss = ss_ref[...]                                                  # (1, 2, 128)
    sc = ss[0, 0, :].reshape(1, 1, 1, Cpb)
    sh = ss[0, 1, :].reshape(1, 1, 1, Cpb)
    y = conv_ref[...] * sc + sh                                       # 2 VALU ops/elem
    o_ref[...] = jnp.maximum(y, 0.0).astype(o_ref.dtype)


def conv3_3_forward(x_nchw, weight, gamma, beta, *, stride=1, eps=1e-5):
    """Pallas equivalent of Conv3_3.forward.  x_nchw: (N, Cin, H, W), weight: (Cout, Cin, 3, 3)."""
    N, Cin, H, W = x_nchw.shape
    Cout = weight.shape[0]
    Ho = (H + 2 - 3) // stride + 1
    Wo = (W + 2 - 3) // stride + 1
    Hp, Wp = H + 2, W + 2
    Cpad = ((Cout + _LANES - 1) // _LANES) * _LANES
    CB = Cpad // _LANES
    itemsize = jnp.dtype(x_nchw.dtype).itemsize

    # ---- glue: layout + padding + weight repack (plain JAX, one pass each) ----
    x_nhwc = jnp.transpose(x_nchw, (0, 2, 3, 1))
    x_pad = jnp.pad(x_nhwc, ((0, 0), (1, 1), (1, 1), (0, 0)))
    # (Cout, Cin, 3, 3) -> rows ordered (kh, kw, Cin); zero-pad columns to Cpad so the
    # accumulator / stores are lane-dense (padded channels stay exactly zero).
    w_packed = jnp.transpose(weight, (2, 3, 1, 0)).reshape(9 * Cin, Cout)
    w_packed = jnp.pad(w_packed.astype(jnp.float32), ((0, 0), (0, Cpad - Cout)))

    # ---- phase 1: conv (single K=9*Cin MXU matmul) + partial BN stats ----
    kernel1 = functools.partial(_conv_stats_kernel, stride=stride)
    conv_f32, stats = pl.pallas_call(
        kernel1,
        grid=(N, CB),
        in_specs=[
            pl.BlockSpec((1, Hp, Wp, Cin), lambda n, co: (n, 0, 0, 0)),
            pl.BlockSpec((9 * Cin, _LANES), lambda n, co: (0, co)),
        ],
        out_specs=(
            pl.BlockSpec((1, Ho, Wo, _LANES), lambda n, co: (n, 0, 0, co)),
            pl.BlockSpec((1, 1, 2, _LANES), lambda n, co: (n, co, 0, 0)),
        ),
        out_shape=(
            jax.ShapeDtypeStruct((N, Ho, Wo, Cpad), jnp.float32),
            jax.ShapeDtypeStruct((N, CB, 2, _LANES), jnp.float32),
        ),
        compiler_params=pltpu.CompilerParams(
            dimension_semantics=("parallel", "parallel")),
        cost_estimate=pl.CostEstimate(
            flops=2 * N * Ho * Wo * 9 * Cin * Cpad,
            transcendentals=0,
            bytes_accessed=(N * Hp * Wp * Cin * CB * itemsize
                            + 9 * Cin * Cpad * 4
                            + N * Ho * Wo * Cpad * 4
                            + N * CB * 2 * _LANES * 4)),
    )(x_pad, w_packed)

    # ---- glue: global BN batch stats -> folded per-channel scale/shift ----
    count = N * Ho * Wo
    ssum = stats[:, :, 0, :].sum(axis=0).reshape(Cpad)
    ssq = stats[:, :, 1, :].sum(axis=0).reshape(Cpad)
    mean = ssum / count
    var = jnp.maximum(ssq / count - mean * mean, 0.0)     # biased var (BN train mode)
    inv_std = jax.lax.rsqrt(var + eps)
    gamma_pad = jnp.pad(gamma.astype(jnp.float32), (0, Cpad - Cout))
    beta_pad = jnp.pad(beta.astype(jnp.float32), (0, Cpad - Cout))
    scale_flat = gamma_pad * inv_std                      # padded channels -> 0
    shift_flat = beta_pad - mean * scale_flat             # padded channels -> 0
    scale_shift = jnp.stack(
        [scale_flat.reshape(CB, _LANES), shift_flat.reshape(CB, _LANES)],
        axis=1)                                           # (CB, 2, 128)
    # TODO(synk): BatchNorm running_mean/running_var buffer updates are a training-time
    # side effect that does not influence this forward output; not emitted.

    # ---- phase 2: apply folded BN + ReLU (lane-dense elementwise pass) ----
    out_pad = pl.pallas_call(
        _bn_relu_kernel,
        grid=(N, CB),
        in_specs=[
            pl.BlockSpec((1, Ho, Wo, _LANES), lambda n, co: (n, 0, 0, co)),
            pl.BlockSpec((1, 2, _LANES), lambda n, co: (co, 0, 0)),
        ],
        out_specs=pl.BlockSpec((1, Ho, Wo, _LANES), lambda n, co: (n, 0, 0, co)),
        out_shape=jax.ShapeDtypeStruct((N, Ho, Wo, Cpad), x_nchw.dtype),
        compiler_params=pltpu.CompilerParams(
            dimension_semantics=("parallel", "parallel")),
        cost_estimate=pl.CostEstimate(
            flops=3 * N * Ho * Wo * Cpad,
            transcendentals=0,
            bytes_accessed=(N * Ho * Wo * Cpad * (4 + itemsize) + CB * 2 * _LANES * 4)),
    )(conv_f32, scale_shift)

    out_nhwc = out_pad[..., :Cout]                        # drop channel padding
    return jnp.transpose(out_nhwc, (0, 3, 1, 2))          # NHWC -> NCHW


def _reference(x_nchw, weight, gamma, beta, *, stride=1, eps=1e-5):
    """Pure-JAX reference matching PyTorch Conv2d + BatchNorm2d(train) + ReLU."""
    conv = jax.lax.conv_general_dilated(
        x_nchw, weight, window_strides=(stride, stride),
        padding=((1, 1), (1, 1)),
        dimension_numbers=("NCHW", "OIHW", "NCHW"))
    mean = conv.mean(axis=(0, 2, 3), keepdims=True)
    var = ((conv - mean) ** 2).mean(axis=(0, 2, 3), keepdims=True)
    y = (conv - mean) / jnp.sqrt(var + eps)
    y = y * gamma.reshape(1, -1, 1, 1) + beta.reshape(1, -1, 1, 1)
    return jnp.maximum(y, 0.0)


if __name__ == "__main__":
    # Small deterministic setup: N=2, Cin=4, H=W=16, Cout=8, stride=1.
    key = jax.random.PRNGKey(0)
    kx, kw, kg, kb = jax.random.split(key, 4)

    N, Cin, H, W, Cout, stride = 2, 4, 16, 16, 8, 1
    x = jax.random.normal(kx, (N, Cin, H, W), dtype=jnp.float32)
    weight = 0.1 * jax.random.normal(kw, (Cout, Cin, 3, 3), dtype=jnp.float32)
    gamma = 1.0 + 0.1 * jax.random.normal(kg, (Cout,), dtype=jnp.float32)
    beta = 0.1 * jax.random.normal(kb, (Cout,), dtype=jnp.float32)

    out = jax.block_until_ready(conv3_3_forward(x, weight, gamma, beta, stride=stride))
    ref = jax.block_until_ready(_reference(x, weight, gamma, beta, stride=stride))
    np.testing.assert_allclose(np.asarray(out), np.asarray(ref), atol=1e-4, rtol=1e-4)

    print("KERNEL_OK")
</pallas_src>

<mosaic_0001>
module attributes {stable_mosaic.version = 11 : i64} {
  func.func @_conv_stats_kernel(%arg0: i32, %arg1: i32, %arg2: memref<1x18x18x4xf32, #tpu.memory_space<vmem>>, %arg3: memref<36x128xf32, #tpu.memory_space<vmem>>, %arg4: memref<1x16x16x128xf32, #tpu.memory_space<vmem>>, %arg5: memref<1x1x2x128xf32, #tpu.memory_space<vmem>>) attributes {dimension_semantics = [#tpu.dimension_semantics<parallel>, #tpu.dimension_semantics<parallel>], iteration_bounds = array<i64: 2, 1>, scalar_prefetch = 0 : i64, scratch_operands = 0 : i64, tpu.core_type = #tpu.core_type<tc>, window_params = [{transform_indices = @transform_0, window_bounds = array<i64: 1, 18, 18, 4>}, {transform_indices = @transform_1, window_bounds = array<i64: 36, 128>}, {transform_indices = @transform_2, window_bounds = array<i64: 1, 16, 16, 128>}, {transform_indices = @transform_3, window_bounds = array<i64: 1, 1, 2, 128>}]} {
    %c0 = arith.constant 0 : index
    %c0_0 = arith.constant 0 : index
    %c0_1 = arith.constant 0 : index
    %c0_2 = arith.constant 0 : index
    %0 = vector.load %arg2[%c0, %c0_0, %c0_1, %c0_2] : memref<1x18x18x4xf32, #tpu.memory_space<vmem>>, vector<1x18x18x4xf32>
    %1 = vector.shape_cast %0 : vector<1x18x18x4xf32> to vector<18x18x4xf32>
    %2 = vector.extract_strided_slice %1 {offsets = [0, 0, 0], sizes = [16, 18, 4], strides = [1, 1, 1]} : vector<18x18x4xf32> to vector<16x18x4xf32>
    %3 = vector.extract_strided_slice %2 {offsets = [0, 0, 0], sizes = [16, 16, 4], strides = [1, 1, 1]} : vector<16x18x4xf32> to vector<16x16x4xf32>
    %4 = vector.shape_cast %3 : vector<16x16x4xf32> to vector<256x4xf32>
    %5 = vector.extract_strided_slice %2 {offsets = [0, 1, 0], sizes = [16, 16, 4], strides = [1, 1, 1]} : vector<16x18x4xf32> to vector<16x16x4xf32>
    %6 = vector.shape_cast %5 : vector<16x16x4xf32> to vector<256x4xf32>
    %7 = vector.extract_strided_slice %2 {offsets = [0, 2, 0], sizes = [16, 16, 4], strides = [1, 1, 1]} : vector<16x18x4xf32> to vector<16x16x4xf32>
    %8 = vector.shape_cast %7 : vector<16x16x4xf32> to vector<256x4xf32>
    %9 = vector.extract_strided_slice %1 {offsets = [1, 0, 0], sizes = [16, 18, 4], strides = [1, 1, 1]} : vector<18x18x4xf32> to vector<16x18x4xf32>
    %10 = vector.extract_strided_slice %9 {offsets = [0, 0, 0], sizes = [16, 16, 4], strides = [1, 1, 1]} : vector<16x18x4xf32> to vector<16x16x4xf32>
    %11 = vector.shape_cast %10 : vector<16x16x4xf32> to vector<256x4xf32>
    %12 = vector.extract_strided_slice %9 {offsets = [0, 1, 0], sizes = [16, 16, 4], strides = [1, 1, 1]} : vector<16x18x4xf32> to vector<16x16x4xf32>
    %13 = vector.shape_cast %12 : vector<16x16x4xf32> to vector<256x4xf32>
    %14 = vector.extract_strided_slice %9 {offsets = [0, 2, 0], sizes = [16, 16, 4], strides = [1, 1, 1]} : vector<16x18x4xf32> to vector<16x16x4xf32>
    %15 = vector.shape_cast %14 : vector<16x16x4xf32> to vector<256x4xf32>
    %16 = vector.extract_strided_slice %1 {offsets = [2, 0, 0], sizes = [16, 18, 4], strides = [1, 1, 1]} : vector<18x18x4xf32> to vector<16x18x4xf32>
    %17 = vector.extract_strided_slice %16 {offsets = [0, 0, 0], sizes = [16, 16, 4], strides = [1, 1, 1]} : vector<16x18x4xf32> to vector<16x16x4xf32>
    %18 = vector.shape_cast %17 : vector<16x16x4xf32> to vector<256x4xf32>
    %19 = vector.extract_strided_slice %16 {offsets = [0, 1, 0], sizes = [16, 16, 4], strides = [1, 1, 1]} : vector<16x18x4xf32> to vector<16x16x4xf32>
    %20 = vector.shape_cast %19 : vector<16x16x4xf32> to vector<256x4xf32>
    %21 = vector.extract_strided_slice %16 {offsets = [0, 2, 0], sizes = [16, 16, 4], strides = [1, 1, 1]} : vector<16x18x4xf32> to vector<16x16x4xf32>
    %22 = vector.shape_cast %21 : vector<16x16x4xf32> to vector<256x4xf32>
    %23 = tpu.concatenate %4, %6, %8, %11, %13, %15, %18, %20, %22 in 1 : vector<256x4xf32>, vector<256x4xf32>, vector<256x4xf32>, vector<256x4xf32>, vector<256x4xf32>, vector<256x4xf32>, vector<256x4xf32>, vector<256x4xf32>, vector<256x4xf32> -> vector<256x36xf32>
    %c0_3 = arith.constant 0 : index
    %c0_4 = arith.constant 0 : index
    %24 = vector.load %arg3[%c0_3, %c0_4] : memref<36x128xf32, #tpu.memory_space<vmem>>, vector<36x128xf32>
    %cst = arith.constant dense<0.000000e+00> : vector<256x128xf32>
    %25 = tpu.matmul %23, %24, %cst {dimension_numbers = #tpu.dot_dimension_numbers<[1], [0], [0], [1], [0, 0, 1, 1], [], []>} : vector<256x36xf32>, vector<36x128xf32>, vector<256x128xf32> -> vector<256x128xf32>
    %26 = vector.shape_cast %25 : vector<256x128xf32> to vector<1x16x16x128xf32>
    %c0_5 = arith.constant 0 : index
    %c0_6 = arith.constant 0 : index
    %c0_7 = arith.constant 0 : index
    %c0_8 = arith.constant 0 : index
    %27 = vector.load %arg4[%c0_5, %c0_6, %c0_7, %c0_8] : memref<1x16x16x128xf32, #tpu.memory_space<vmem>>, vector<1x16x16x128xf32>
    tpu.vector_store %arg4[%c0_5, %c0_6, %c0_7, %c0_8], %26 {strides = array<i32>} : memref<1x16x16x128xf32, #tpu.memory_space<vmem>>, vector<1x16x16x128xf32>,
    %cst_9 = arith.constant dense<0.000000e+00> : vector<128xf32>
    %28 = vector.multi_reduction <add>, %25, %cst_9 [0] : vector<256x128xf32> to vector<128xf32>
    %29 = vector.shape_cast %28 : vector<128xf32> to vector<1x128xf32>
    %30 = arith.mulf %25, %25 : vector<256x128xf32>
    %cst_10 = arith.constant dense<0.000000e+00> : vector<128xf32>
    %31 = vector.multi_reduction <add>, %30, %cst_10 [0] : vector<256x128xf32> to vector<128xf32>
    %32 = vector.shape_cast %31 : vector<128xf32> to vector<1x128xf32>
    %33 = tpu.concatenate %29, %32 in 0 : vector<1x128xf32>, vector<1x128xf32> -> vector<2x128xf32>
    %34 = vector.shape_cast %33 : vector<2x128xf32> to vector<1x1x2x128xf32>
    %c0_11 = arith.constant 0 : index
    %c0_12 = arith.constant 0 : index
    %c0_13 = arith.constant 0 : index
    %c0_14 = arith.constant 0 : index
    %35 = vector.load %arg5[%c0_11, %c0_12, %c0_13, %c0_14] : memref<1x1x2x128xf32, #tpu.memory_space<vmem>>, vector<1x1x2x128xf32>
    tpu.vector_store %arg5[%c0_11, %c0_12, %c0_13, %c0_14], %34 {strides = array<i32>} : memref<1x1x2x128xf32, #tpu.memory_space<vmem>>, vector<1x1x2x128xf32>,
    return
  }
  func.func @transform_0(%arg0: i32, %arg1: i32) -> (i32, i32, i32, i32) {
    %c0_i32 = arith.constant 0 : i32
    %c0_i32_0 = arith.constant 0 : i32
    %c0_i32_1 = arith.constant 0 : i32
    %c0_i32_2 = arith.constant 0 : i32
    return %arg0, %c0_i32, %c0_i32_0, %c0_i32_1 : i32, i32, i32, i32
  }
  func.func @transform_1(%arg0: i32, %arg1: i32) -> (i32, i32) {
    %c0_i32 = arith.constant 0 : i32
    %c0_i32_0 = arith.constant 0 : i32
    return %c0_i32, %arg1 : i32, i32
  }
  func.func @transform_2(%arg0: i32, %arg1: i32) -> (i32, i32, i32, i32) {
    %c0_i32 = arith.constant 0 : i32
    %c0_i32_0 = arith.constant 0 : i32
    %c0_i32_1 = arith.constant 0 : i32
    return %arg0, %c0_i32, %c0_i32_0, %arg1 : i32, i32, i32, i32
  }
  func.func @transform_3(%arg0: i32, %arg1: i32) -> (i32, i32, i32, i32) {
    %c0_i32 = arith.constant 0 : i32
    %c0_i32_0 = arith.constant 0 : i32
    %c0_i32_1 = arith.constant 0 : i32
    return %arg0, %arg1, %c0_i32, %c0_i32_0 : i32, i32, i32, i32
  }
}

</mosaic_0001>

<llo_original>
// kernel: tpu_custom_call.1
$region0: #{tpu_custom_call.1}
  #allocation0 [shape = 'u32[]', space=smem, size = 0x4, offset = 0x4, fixed_abs, tag = 'smem constant byte address 0x4 - core index']
  #allocation1 [shape = 'u32[72,128]{1,0:T(1,128)}', space=vmem, size = 0x9000, scoped, tag = 'internal scratch']
  %s0 = inlined_call_operand.vmem [shape: f32[2,18,18,4], index: 0, kind: input, shape index: {}]
  %s1 = inlined_call_operand.vmem [shape: f32[36,128], index: 1, kind: input, shape index: {}]
  %s2 = inlined_call_operand.hbm [shape: f32[2,16,16,128], index: 2, kind: output, shape index: {0}]
  %s3 = inlined_call_operand.hbm [shape: f32[2,1,2,128], index: 3, kind: output, shape index: {1}]
  %4 = xla_tuple %s2, %s3
  %s5 = sld [smem:[#allocation0]]
  $region49: #{tpu_custom_call.1} parent=0
    _
  %s7 = ssub.s32 1, %s5
  %s8 = scalar_select 0, %s7, %s5
  $region1: #{tpu_custom_call.1} parent=0
    #allocation2 [shape = 'u8[262144]{0}', space=vmem, size = 0x40000, scoped, tag = 'output window, operand 0']
    #allocation3 [shape = 's32[2]{0}', space=sflag, size = 0x8, scoped, tag = 'scoped memory for tpu_custom_call.1']
    #allocation4 [shape = 'u8[2048]{0}', space=vmem, size = 0x800, scoped, tag = 'output window, operand 1']
    #allocation5 [shape = 's32[2]{0}', space=sflag, size = 0x8, scoped, tag = 'scoped memory for tpu_custom_call.1']
    %9 = vsyncpa [#allocation3], 0
    %s10 = scalar_lea.sflag [#allocation3], 1
    %11 = vsyncpa %s10, 0
    %12 = vsyncpa [#allocation5], 0
    %s13 = scalar_lea.sflag [#allocation5], 1
    %14 = vsyncpa %s13, 0
    loop: start=0, step=1, limit=4
    $region2: #{tpu_custom_call.1} parent=1 // loop_pre_header
      _
    $region3: #{tpu_custom_call.1} parent=1 // loop_header
      %s16 = sphi 0, %s20
      %p17 = scmp.ge.s32.totalorder %s16, 4
      %s23 = sphi 0, %s35
      %s24 = sphi 0, %s31
      %s25 = sphi 0, %s23
      %s26 = sphi 0, %s24
      %s27 = sphi 0, %s25
      %s28 = sphi 0, %s26
      %s38 = sphi 0, %s40
      %s41 = sphi 0, %s38
      %s42 = sphi 0, %s41
      %s58 = sphi 0, %s42
      %s64 = sphi 0, %s66
      %s67 = sphi 0, %s64
      %s68 = sphi 0, %s67
      %s84 = sphi 0, %s68
      %s92 = sphi 0, %s94
      %s95 = sphi 0, %s92
      %s96 = sphi 0, %s95
      %s112 = sphi 0, %s96
      %s120 = sphi 0, %s122
      %s123 = sphi 0, %s120
      %s124 = sphi 0, %s123
      %s140 = sphi 0, %s124
    $region4: #{tpu_custom_call.1} parent=1 // loop_header_branch
      %19 = sbr.rel (%p17) target = $region8
    $region5: #{tpu_custom_call.1} parent=1 // loop_body
      %s21 = ssub.s32 %s16, 1
      %s22 = ssub.s32 %s16, 2
      %s29 = sadd.s32 1, %s24
      %p30 = scmp.ge.s32.totalorder %s29, 1
      %s31 = scalar_select %p30, 0, %s29
      %s32 = sadd.s32 1, %s23
      %s33 = scalar_select %p30, %s32, %s23
      %p34 = scmp.ge.s32.totalorder %s33, 2
      %s35 = scalar_select %p34, 0, %s33
      %s36 = ssub.s32 %s23, %s35
      %p37 = scmp.eq.s32.totalorder %s36, 0
      %s39 = sadd.s32 %s38, 1
      %s40 = scalar_select %p37, %s38, %s39
      %p43 = pneg %p37
      %p44 = scmp.eq.s32.totalorder %s16, 1
      %p45 = por %p43, %p44
      %p46 = scmp.ne.s32.totalorder %s38, %s41
      %p47 = scmp.eq.s32.totalorder %s16, 0
      %p48 = por %p46, %p47
      %p49 = scmp.ne.s32.totalorder %s38, %s41
      %p50 = scmp.eq.s32.totalorder %s21, 1
      %p51 = por %p49, %p50
      %p52 = scmp.ne.s32.totalorder %s41, %s42
      %p53 = scmp.eq.s32.totalorder %s21, 0
      %p54 = por %p52, %p53
      %p55 = scmp.ne.s32.totalorder %s41, %s42
      %p56 = scmp.eq.s32.totalorder %s22, 1
      %p57 = por %p55, %p56
      %p59 = scmp.ne.s32.totalorder %s42, %s58
      %p60 = scmp.eq.s32.totalorder %s22, 0
      %p61 = por %p59, %p60
      %s62 = ssub.s32 %s24, %s31
      %p63 = scmp.eq.s32.totalorder %s62, 0
      %s65 = sadd.s32 %s64, 1
      %s66 = scalar_select %p63, %s64, %s65
      %p69 = pneg %p63
      %p70 = scmp.eq.s32.totalorder %s16, 1
      %p71 = por %p69, %p70
      %p72 = scmp.ne.s32.totalorder %s64, %s67
      %p73 = scmp.eq.s32.totalorder %s16, 0
      %p74 = por %p72, %p73
      %p75 = scmp.ne.s32.totalorder %s64, %s67
      %p76 = scmp.eq.s32.totalorder %s21, 1
      %p77 = por %p75, %p76
      %p78 = scmp.ne.s32.totalorder %s67, %s68
      %p79 = scmp.eq.s32.totalorder %s21, 0
      %p80 = por %p78, %p79
      %p81 = scmp.ne.s32.totalorder %s67, %s68
      %p82 = scmp.eq.s32.totalorder %s22, 1
      %p83 = por %p81, %p82
      %p85 = scmp.ne.s32.totalorder %s68, %s84
      %p86 = scmp.eq.s32.totalorder %s22, 0
      %p87 = por %p85, %p86
      %s88 = ssub.s32 %s23, %s35
      %s89 = ssub.s32 %s24, %s31
      %s90 = sor.u32 %s88, %s89
      %p91 = scmp.eq.s32.totalorder %s90, 0
      %s93 = sadd.s32 %s92, 1
      %s94 = scalar_select %p91, %s92, %s93
      %p97 = pneg %p91
      %p98 = scmp.eq.s32.totalorder %s16, 1
      %p99 = por %p97, %p98
      %p100 = scmp.ne.s32.totalorder %s92, %s95
      %p101 = scmp.eq.s32.totalorder %s16, 0
      %p102 = por %p100, %p101
      %p103 = scmp.ne.s32.totalorder %s92, %s95
      %p104 = scmp.eq.s32.totalorder %s21, 1
      %p105 = por %p103, %p104
      %p106 = scmp.ne.s32.totalorder %s95, %s96
      %p107 = scmp.eq.s32.totalorder %s21, 0
      %p108 = por %p106, %p107
      %p109 = scmp.ne.s32.totalorder %s95, %s96
      %p110 = scmp.eq.s32.totalorder %s22, 1
      %p111 = por %p109, %p110
      %p113 = scmp.ne.s32.totalorder %s96, %s112
      %p114 = scmp.eq.s32.totalorder %s22, 0
      %p115 = por %p113, %p114
      %s116 = ssub.s32 %s23, %s35
      %s117 = ssub.s32 %s24, %s31
      %s118 = sor.u32 %s116, %s117
      %p119 = scmp.eq.s32.totalorder %s118, 0
      %s121 = sadd.s32 %s120, 1
      %s122 = scalar_select %p119, %s120, %s121
      %p125 = pneg %p119
      %p126 = scmp.eq.s32.totalorder %s16, 1
      %p127 = por %p125, %p126
      %p128 = scmp.ne.s32.totalorder %s120, %s123
      %p129 = scmp.eq.s32.totalorder %s16, 0
      %p130 = por %p128, %p129
      %p131 = scmp.ne.s32.totalorder %s120, %s123
      %p132 = scmp.eq.s32.totalorder %s21, 1
      %p133 = por %p131, %p132
      %p134 = scmp.ne.s32.totalorder %s123, %s124
      %p135 = scmp.eq.s32.totalorder %s21, 0
      %p136 = por %p134, %p135
      %p137 = scmp.ne.s32.totalorder %s123, %s124
      %p138 = scmp.eq.s32.totalorder %s22, 1
      %p139 = por %p137, %p138
      %p141 = scmp.ne.s32.totalorder %s124, %s140
      %p142 = scmp.eq.s32.totalorder %s22, 0
      %p143 = por %p141, %p142
      %p144 = scmp.le.s32.totalorder 1, %s16
      %p145 = scmp.lt.s32.totalorder %s16, 3
      %p146 = pnand %p144, %p145
      %p147 = pneg %p146
      // Predicated region
      $region9: #{tpu_custom_call.1} parent=5 // pred_check
        _
      $region10: #{tpu_custom_call.1} parent=5 // pred_check_branch
        %149 = sbr.rel (%p146) target = $region12
      $region11: #{tpu_custom_call.1} parent=5 // pred_region
        %s150 = ssub.s32 %s16, 1
        // Predicated region
        $region13: #{tpu_custom_call.1} parent=11 // pred_check
          %p151 = pneg %p80
        $region14: #{tpu_custom_call.1} parent=11 // pred_check_branch
          %153 = sbr.rel (%p151) target = $region16
        $region15: #{tpu_custom_call.1} parent=11 // pred_region
          %p154 = scmp.lt.s32.totalorder %s26, 0
          %s155 = scalar_select %p154, %s26, 0
          %s156 = smul.addr %s155, 8
          %s157 = scalar_lea.vmem %s1, %s156
        $region16: #{tpu_custom_call.1} parent=11 // pred_fallthru
          _
      $region12: #{tpu_custom_call.1} parent=5 // pred_fallthru
        _
      %p158 = scmp.lt.s32.totalorder %s16, 2
      // Predicated region
      $region17: #{tpu_custom_call.1} parent=5 // pred_check
        %p159 = pneg %p158
      $region18: #{tpu_custom_call.1} parent=5 // pred_check_branch
        %161 = sbr.rel (%p159) target = $region20
      $region19: #{tpu_custom_call.1} parent=5 // pred_region
        // Predicated region
        $region21: #{tpu_custom_call.1} parent=19 // pred_check
          %p162 = pneg %p48
        $region22: #{tpu_custom_call.1} parent=19 // pred_check_branch
          %164 = sbr.rel (%p162) target = $region24
        $region23: #{tpu_custom_call.1} parent=19 // pred_region
          %p165 = scmp.lt.s32.totalorder %s23, 1
          %s166 = scalar_select %p165, %s23, 1
          %s167 = smul.addr %s166, 54
          %s168 = smul.addr %s167, 8
          %s169 = scalar_lea.vmem %s0, %s168
        $region24: #{tpu_custom_call.1} parent=19 // pred_fallthru
          _
      $region20: #{tpu_custom_call.1} parent=5 // pred_fallthru
        _
      %p170 = scmp.le.s32.totalorder 1, %s16
      %p171 = scmp.lt.s32.totalorder %s16, 3
      %p172 = pnand %p170, %p171
      %p173 = pneg %p172
      // Predicated region
      $region25: #{tpu_custom_call.1} parent=5 // pred_check
        _
      $region26: #{tpu_custom_call.1} parent=5 // pred_check_branch
        %175 = sbr.rel (%p172) target = $region28
      $region27: #{tpu_custom_call.1} parent=5 // pred_region
        %s176 = ssub.s32 %s16, 1
        %p177 = scmp.lt.s32.totalorder %s25, 1
        %s178 = scalar_select %p177, %s25, 1
        %s179 = smul.addr %s178, 54
        %s180 = smul.addr %s179, 8
        %s181 = scalar_lea.vmem %s0, %s180
        %p182 = pneg %p54
        %p183 = pneg %p51
        %p184 = scmp.lt.s32.totalorder %s26, 0
        %s185 = scalar_select %p184, %s26, 0
        %s186 = smul.addr %s185, 8
        %s187 = scalar_lea.vmem %s1, %s186
        %p188 = pneg %p80
        %p189 = pneg %p77
        %p190 = pneg %p108
        %p191 = pneg %p105
        %s192 = sand.u32 %s95, 1
        %s193 = scalar_lea.sflag [#allocation3], %s192
        %s194 = sand.u32 %s95, 1
        %s195 = smul.addr %s194, 256
        %s196 = scalar_lea.vmem [#allocation2], %s195
        %p197 = pneg %p136
        %p198 = pneg %p133
        %s199 = sand.u32 %s123, 1
        %s200 = scalar_lea.sflag [#allocation5], %s199
        %s201 = sand.u32 %s123, 1
        %s202 = smul.addr %s201, 2
        %s203 = scalar_lea.vmem [#allocation4], %s202
        %p204 = scmp.lt.s32.totalorder %s25, 1
        %s205 = scalar_select %p204, %s25, 1
        %s206 = smul.addr %s205, 54
        %s207 = smul.addr %s206, 8
        %s208 = scalar_lea.vmem %s0, %s207
        %p209 = scmp.lt.s32.totalorder %s26, 0
        %s210 = scalar_select %p209, %s26, 0
        %s211 = smul.addr %s210, 8
        %s212 = scalar_lea.vmem %s1, %s211
        %v213 = vld [vmem:[%s208] sm:$0xff]
        %v214 = vld [vmem:[%s208 + $0x8] sm:$0xff]
        %v215 = vld [vmem:[%s208 + $0x10] sm:$0x3]
        %v216 = vld [vmem:[%s208 + $0x18] sm:$0xff]
        %v217 = vld [vmem:[%s208 + $0x20] sm:$0xff]
        %v218 = vld [vmem:[%s208 + $0x28] sm:$0x3]
        %v219 = vld [vmem:[%s208 + $0x30] sm:$0xff]
        %v220 = vld [vmem:[%s208 + $0x38] sm:$0xff]
        %v221 = vld [vmem:[%s208 + $0x40] sm:$0x3]
        %v222 = vld [vmem:[%s208 + $0x48] sm:$0xff]
        %v223 = vld [vmem:[%s208 + $0x50] sm:$0xff]
        %v224 = vld [vmem:[%s208 + $0x58] sm:$0x3]
        %v225 = vld [vmem:[%s208 + $0x60] sm:$0xff]
        %v226 = vld [vmem:[%s208 + $0x68] sm:$0xff]
        %v227 = vld [vmem:[%s208 + $0x70] sm:$0x3]
        %v228 = vld [vmem:[%s208 + $0x78] sm:$0xff]
        %v229 = vld [vmem:[%s208 + $0x80] sm:$0xff]
        %v230 = vld [vmem:[%s208 + $0x88] sm:$0x3]
        %v231 = vld [vmem:[%s208 + $0x90] sm:$0xff]
        %v232 = vld [vmem:[%s208 + $0x98] sm:$0xff]
        %v233 = vld [vmem:[%s208 + $0xa0] sm:$0x3]
        %v234 = vld [vmem:[%s208 + $0xa8] sm:$0xff]
        %v235 = vld [vmem:[%s208 + $0xb0] sm:$0xff]
        %v236 = vld [vmem:[%s208 + $0xb8] sm:$0x3]
        %v237 = vld [vmem:[%s208 + $0xc0] sm:$0xff]
        %v238 = vld [vmem:[%s208 + $0xc8] sm:$0xff]
        %v239 = vld [vmem:[%s208 + $0xd0] sm:$0x3]
        %v240 = vld [vmem:[%s208 + $0xd8] sm:$0xff]
        %v241 = vld [vmem:[%s208 + $0xe0] sm:$0xff]
        %v242 = vld [vmem:[%s208 + $0xe8] sm:$0x3]
        %v243 = vld [vmem:[%s208 + $0xf0] sm:$0xff]
        %v244 = vld [vmem:[%s208 + $0xf8] sm:$0xff]
        %v245 = vld [vmem:[%s208 + $0x100] sm:$0x3]
        %v246 = vld [vmem:[%s208 + $0x108] sm:$0xff]
        %v247 = vld [vmem:[%s208 + $0x110] sm:$0xff]
        %v248 = vld [vmem:[%s208 + $0x118] sm:$0x3]
        %v249 = vld [vmem:[%s208 + $0x120] sm:$0xff]
        %v250 = vld [vmem:[%s208 + $0x128] sm:$0xff]
        %v251 = vld [vmem:[%s208 + $0x130] sm:$0x3]
        %v252 = vld [vmem:[%s208 + $0x138] sm:$0xff]
        %v253 = vld [vmem:[%s208 + $0x140] sm:$0xff]
        %v254 = vld [vmem:[%s208 + $0x148] sm:$0x3]
        %v255 = vld [vmem:[%s208 + $0x150] sm:$0xff]
        %v256 = vld [vmem:[%s208 + $0x158] sm:$0xff]
        %v257 = vld [vmem:[%s208 + $0x160] sm:$0x3]
        %v258 = vld [vmem:[%s208 + $0x168] sm:$0xff]
        %v259 = vld [vmem:[%s208 + $0x170] sm:$0xff]
        %v260 = vld [vmem:[%s208 + $0x178] sm:$0x3]
        %v261 = vld [vmem:[%s208 + $0x180] sm:$0xff]
        %v262 = vld [vmem:[%s208 + $0x188] sm:$0xff]
        %v263 = vld [vmem:[%s208 + $0x190] sm:$0x3]
        %v264 = vld [vmem:[%s208 + $0x198] sm:$0xff]
        %v265 = vld [vmem:[%s208 + $0x1a0] sm:$0xff]
        %v266 = vld [vmem:[%s208 + $0x1a8] sm:$0x3]
        %vm315 = vcmask 1046528
        %v316 = vrot.slane %v213, 1
        %v317 = vrot.slane %v214, 1
        %v318 = vsel %vm315, %v316, %v317
        %v319 = vrot.slane %v215, 1
        %v320 = vsel %vm315, %v317, %v319
        %v321 = vrot.slane %v216, 1
        %v322 = vrot.slane %v217, 1
        %v323 = vsel %vm315, %v321, %v322
        %v324 = vrot.slane %v218, 1
        %v325 = vsel %vm315, %v322, %v324
        %v326 = vrot.slane %v219, 1
        %v327 = vrot.slane %v220, 1
        %v328 = vsel %vm315, %v326, %v327
        %v329 = vrot.slane %v221, 1
        %v330 = vsel %vm315, %v327, %v329
        %v331 = vrot.slane %v222, 1
        %v332 = vrot.slane %v223, 1
        %v333 = vsel %vm315, %v331, %v332
        %v334 = vrot.slane %v224, 1
        %v335 = vsel %vm315, %v332, %v334
        %v336 = vrot.slane %v225, 1
        %v337 = vrot.slane %v226, 1
        %v338 = vsel %vm315, %v336, %v337
        %v339 = vrot.slane %v227, 1
        %v340 = vsel %vm315, %v337, %v339
        %v341 = vrot.slane %v228, 1
        %v342 = vrot.slane %v229, 1
        %v343 = vsel %vm315, %v341, %v342
        %v344 = vrot.slane %v230, 1
        %v345 = vsel %vm315, %v342, %v344
        %v346 = vrot.slane %v231, 1
        %v347 = vrot.slane %v232, 1
        %v348 = vsel %vm315, %v346, %v347
        %v349 = vrot.slane %v233, 1
        %v350 = vsel %vm315, %v347, %v349
        %v351 = vrot.slane %v234, 1
        %v352 = vrot.slane %v235, 1
        %v353 = vsel %vm315, %v351, %v352
        %v354 = vrot.slane %v236, 1
        %v355 = vsel %vm315, %v352, %v354
        %v356 = vrot.slane %v237, 1
        %v357 = vrot.slane %v238, 1
        %v358 = vsel %vm315, %v356, %v357
        %v359 = vrot.slane %v239, 1
        %v360 = vsel %vm315, %v357, %v359
        %v361 = vrot.slane %v240, 1
        %v362 = vrot.slane %v241, 1
        %v363 = vsel %vm315, %v361, %v362
        %v364 = vrot.slane %v242, 1
        %v365 = vsel %vm315, %v362, %v364
        %v366 = vrot.slane %v243, 1
        %v367 = vrot.slane %v244, 1
        %v368 = vsel %vm315, %v366, %v367
        %v369 = vrot.slane %v245, 1
        %v370 = vsel %vm315, %v367, %v369
        %v371 = vrot.slane %v246, 1
        %v372 = vrot.slane %v247, 1
        %v373 = vsel %vm315, %v371, %v372
        %v374 = vrot.slane %v248, 1
        %v375 = vsel %vm315, %v372, %v374
        %v376 = vrot.slane %v249, 1
        %v377 = vrot.slane %v250, 1
        %v378 = vsel %vm315, %v376, %v377
        %v379 = vrot.slane %v251, 1
        %v380 = vsel %vm315, %v377, %v379
        %v381 = vrot.slane %v252, 1
        %v382 = vrot.slane %v253, 1
        %v383 = vsel %vm315, %v381, %v382
        %v384 = vrot.slane %v254, 1
        %v385 = vsel %vm315, %v382, %v384
        %v386 = vrot.slane %v255, 1
        %v387 = vrot.slane %v256, 1
        %v388 = vsel %vm315, %v386, %v387
        %v389 = vrot.slane %v257, 1
        %v390 = vsel %vm315, %v387, %v389
        %v391 = vrot.slane %v258, 1
        %v392 = vrot.slane %v259, 1
        %v393 = vsel %vm315, %v391, %v392
        %v394 = vrot.slane %v260, 1
        %v395 = vsel %vm315, %v392, %v394
        %vm396 = vcmask 1045504
        %v397 = vrot.slane %v213, 2
        %v398 = vrot.slane %v214, 2
        %v399 = vsel %vm396, %v397, %v398
        %v400 = vrot.slane %v215, 2
        %v401 = vsel %vm396, %v398, %v400
        %v402 = vrot.slane %v216, 2
        %v403 = vrot.slane %v217, 2
        %v404 = vsel %vm396, %v402, %v403
        %v405 = vrot.slane %v218, 2
        %v406 = vsel %vm396, %v403, %v405
        %v407 = vrot.slane %v219, 2
        %v408 = vrot.slane %v220, 2
        %v409 = vsel %vm396, %v407, %v408
        %v410 = vrot.slane %v221, 2
        %v411 = vsel %vm396, %v408, %v410
        %v412 = vrot.slane %v222, 2
        %v413 = vrot.slane %v223, 2
        %v414 = vsel %vm396, %v412, %v413
        %v415 = vrot.slane %v224, 2
        %v416 = vsel %vm396, %v413, %v415
        %v417 = vrot.slane %v225, 2
        %v418 = vrot.slane %v226, 2
        %v419 = vsel %vm396, %v417, %v418
        %v420 = vrot.slane %v227, 2
        %v421 = vsel %vm396, %v418, %v420
        %v422 = vrot.slane %v228, 2
        %v423 = vrot.slane %v229, 2
        %v424 = vsel %vm396, %v422, %v423
        %v425 = vrot.slane %v230, 2
        %v426 = vsel %vm396, %v423, %v425
        %v427 = vrot.slane %v231, 2
        %v428 = vrot.slane %v232, 2
        %v429 = vsel %vm396, %v427, %v428
        %v430 = vrot.slane %v233, 2
        %v431 = vsel %vm396, %v428, %v430
        %v432 = vrot.slane %v234, 2
        %v433 = vrot.slane %v235, 2
        %v434 = vsel %vm396, %v432, %v433
        %v435 = vrot.slane %v236, 2
        %v436 = vsel %vm396, %v433, %v435
        %v437 = vrot.slane %v237, 2
        %v438 = vrot.slane %v238, 2
        %v439 = vsel %vm396, %v437, %v438
        %v440 = vrot.slane %v239, 2
        %v441 = vsel %vm396, %v438, %v440
        %v442 = vrot.slane %v240, 2
        %v443 = vrot.slane %v241, 2
        %v444 = vsel %vm396, %v442, %v443
        %v445 = vrot.slane %v242, 2
        %v446 = vsel %vm396, %v443, %v445
        %v447 = vrot.slane %v243, 2
        %v448 = vrot.slane %v244, 2
        %v449 = vsel %vm396, %v447, %v448
        %v450 = vrot.slane %v245, 2
        %v451 = vsel %vm396, %v448, %v450
        %v452 = vrot.slane %v246, 2
        %v453 = vrot.slane %v247, 2
        %v454 = vsel %vm396, %v452, %v453
        %v455 = vrot.slane %v248, 2
        %v456 = vsel %vm396, %v453, %v455
        %v457 = vrot.slane %v249, 2
        %v458 = vrot.slane %v250, 2
        %v459 = vsel %vm396, %v457, %v458
        %v460 = vrot.slane %v251, 2
        %v461 = vsel %vm396, %v458, %v460
        %v462 = vrot.slane %v252, 2
        %v463 = vrot.slane %v253, 2
        %v464 = vsel %vm396, %v462, %v463
        %v465 = vrot.slane %v254, 2
        %v466 = vsel %vm396, %v463, %v465
        %v467 = vrot.slane %v255, 2
        %v468 = vrot.slane %v256, 2
        %v469 = vsel %vm396, %v467, %v468
        %v470 = vrot.slane %v257, 2
        %v471 = vsel %vm396, %v468, %v470
        %v472 = vrot.slane %v258, 2
        %v473 = vrot.slane %v259, 2
        %v474 = vsel %vm396, %v472, %v473
        %v475 = vrot.slane %v260, 2
        %v476 = vsel %vm396, %v473, %v475
        %v480 = vrot.slane %v261, 1
        %v481 = vrot.slane %v262, 1
        %v482 = vsel %vm315, %v480, %v481
        %v483 = vrot.slane %v263, 1
        %v484 = vsel %vm315, %v481, %v483
        %v485 = vrot.slane %v261, 2
        %v486 = vrot.slane %v262, 2
        %v487 = vsel %vm396, %v485, %v486
        %v488 = vrot.slane %v263, 2
        %v489 = vsel %vm396, %v486, %v488
        %v493 = vrot.slane %v264, 1
        %v494 = vrot.slane %v265, 1
        %v495 = vsel %vm315, %v493, %v494
        %v496 = vrot.slane %v266, 1
        %v497 = vsel %vm315, %v494, %v496
        %v498 = vrot.slane %v264, 2
        %v499 = vrot.slane %v265, 2
        %v500 = vsel %vm396, %v498, %v499
        %v501 = vrot.slane %v266, 2
        %v502 = vsel %vm396, %v499, %v501
        %503 = vrot.lane.b32.xlu0 %v318, 4
        %v504 = vpop.permute.xlu0 %503
        %505 = vrot.lane.b32.xlu0 %v320, 4
        %v506 = vpop.permute.xlu0 %505
        %507 = vrot.lane.b32.xlu0 %v323, 4
        %v508 = vpop.permute.xlu0 %507
        %509 = vrot.lane.b32.xlu0 %v325, 4
        %v510 = vpop.permute.xlu0 %509
        %511 = vrot.lane.b32.xlu0 %v328, 4
        %v512 = vpop.permute.xlu0 %511
        %513 = vrot.lane.b32.xlu0 %v330, 4
        %v514 = vpop.permute.xlu0 %513
        %515 = vrot.lane.b32.xlu0 %v333, 4
        %v516 = vpop.permute.xlu0 %515
        %517 = vrot.lane.b32.xlu0 %v335, 4
        %v518 = vpop.permute.xlu0 %517
        %519 = vrot.lane.b32.xlu0 %v338, 4
        %v520 = vpop.permute.xlu0 %519
        %521 = vrot.lane.b32.xlu0 %v340, 4
        %v522 = vpop.permute.xlu0 %521
        %523 = vrot.lane.b32.xlu0 %v343, 4
        %v524 = vpop.permute.xlu0 %523
        %525 = vrot.lane.b32.xlu0 %v345, 4
        %v526 = vpop.permute.xlu0 %525
        %527 = vrot.lane.b32.xlu0 %v348, 4
        %v528 = vpop.permute.xlu0 %527
        %529 = vrot.lane.b32.xlu0 %v350, 4
        %v530 = vpop.permute.xlu0 %529
        %531 = vrot.lane.b32.xlu0 %v353, 4
        %v532 = vpop.permute.xlu0 %531
        %533 = vrot.lane.b32.xlu0 %v355, 4
        %v534 = vpop.permute.xlu0 %533
        %535 = vrot.lane.b32.xlu0 %v358, 4
        %v536 = vpop.permute.xlu0 %535
        %537 = vrot.lane.b32.xlu0 %v360, 4
        %v538 = vpop.permute.xlu0 %537
        %539 = vrot.lane.b32.xlu0 %v363, 4
        %v540 = vpop.permute.xlu0 %539
        %541 = vrot.lane.b32.xlu0 %v365, 4
        %v542 = vpop.permute.xlu0 %541
        %543 = vrot.lane.b32.xlu0 %v368, 4
        %v544 = vpop.permute.xlu0 %543
        %545 = vrot.lane.b32.xlu0 %v370, 4
        %v546 = vpop.permute.xlu0 %545
        %547 = vrot.lane.b32.xlu0 %v373, 4
        %v548 = vpop.permute.xlu0 %547
        %549 = vrot.lane.b32.xlu0 %v375, 4
        %v550 = vpop.permute.xlu0 %549
        %551 = vrot.lane.b32.xlu0 %v378, 4
        %v552 = vpop.permute.xlu0 %551
        %553 = vrot.lane.b32.xlu0 %v380, 4
        %v554 = vpop.permute.xlu0 %553
        %555 = vrot.lane.b32.xlu0 %v383, 4
        %v556 = vpop.permute.xlu0 %555
        %557 = vrot.lane.b32.xlu0 %v385, 4
        %v558 = vpop.permute.xlu0 %557
        %559 = vrot.lane.b32.xlu0 %v388, 4
        %v560 = vpop.permute.xlu0 %559
        %561 = vrot.lane.b32.xlu0 %v390, 4
        %v562 = vpop.permute.xlu0 %561
        %563 = vrot.lane.b32.xlu0 %v393, 4
        %v564 = vpop.permute.xlu0 %563
        %565 = vrot.lane.b32.xlu0 %v395, 4
        %v566 = vpop.permute.xlu0 %565
        %599 = vrot.lane.b32.xlu0 %v399, 8
        %v600 = vpop.permute.xlu0 %599
        %601 = vrot.lane.b32.xlu0 %v401, 8
        %v602 = vpop.permute.xlu0 %601
        %603 = vrot.lane.b32.xlu0 %v404, 8
        %v604 = vpop.permute.xlu0 %603
        %605 = vrot.lane.b32.xlu0 %v406, 8
        %v606 = vpop.permute.xlu0 %605
        %607 = vrot.lane.b32.xlu0 %v409, 8
        %v608 = vpop.permute.xlu0 %607
        %609 = vrot.lane.b32.xlu0 %v411, 8
        %v610 = vpop.permute.xlu0 %609
        %611 = vrot.lane.b32.xlu0 %v414, 8
        %v612 = vpop.permute.xlu0 %611
        %613 = vrot.lane.b32.xlu0 %v416, 8
        %v614 = vpop.permute.xlu0 %613
        %615 = vrot.lane.b32.xlu0 %v419, 8
        %v616 = vpop.permute.xlu0 %615
        %617 = vrot.lane.b32.xlu0 %v421, 8
        %v618 = vpop.permute.xlu0 %617
        %619 = vrot.lane.b32.xlu0 %v424, 8
        %v620 = vpop.permute.xlu0 %619
        %621 = vrot.lane.b32.xlu0 %v426, 8
        %v622 = vpop.permute.xlu0 %621
        %623 = vrot.lane.b32.xlu0 %v429, 8
        %v624 = vpop.permute.xlu0 %623
        %625 = vrot.lane.b32.xlu0 %v431, 8
        %v626 = vpop.permute.xlu0 %625
        %627 = vrot.lane.b32.xlu0 %v434, 8
        %v628 = vpop.permute.xlu0 %627
        %629 = vrot.lane.b32.xlu0 %v436, 8
        %v630 = vpop.permute.xlu0 %629
        %631 = vrot.lane.b32.xlu0 %v439, 8
        %v632 = vpop.permute.xlu0 %631
        %633 = vrot.lane.b32.xlu0 %v441, 8
        %v634 = vpop.permute.xlu0 %633
        %635 = vrot.lane.b32.xlu0 %v444, 8
        %v636 = vpop.permute.xlu0 %635
        %637 = vrot.lane.b32.xlu0 %v446, 8
        %v638 = vpop.permute.xlu0 %637
        %639 = vrot.lane.b32.xlu0 %v449, 8
        %v640 = vpop.permute.xlu0 %639
        %641 = vrot.lane.b32.xlu0 %v451, 8
        %v642 = vpop.permute.xlu0 %641
        %643 = vrot.lane.b32.xlu0 %v454, 8
        %v644 = vpop.permute.xlu0 %643
        %645 = vrot.lane.b32.xlu0 %v456, 8
        %v646 = vpop.permute.xlu0 %645
        %647 = vrot.lane.b32.xlu0 %v459, 8
        %v648 = vpop.permute.xlu0 %647
        %649 = vrot.lane.b32.xlu0 %v461, 8
        %v650 = vpop.permute.xlu0 %649
        %651 = vrot.lane.b32.xlu0 %v464, 8
        %v652 = vpop.permute.xlu0 %651
        %653 = vrot.lane.b32.xlu0 %v466, 8
        %v654 = vpop.permute.xlu0 %653
        %655 = vrot.lane.b32.xlu0 %v469, 8
        %v656 = vpop.permute.xlu0 %655
        %657 = vrot.lane.b32.xlu0 %v471, 8
        %v658 = vpop.permute.xlu0 %657
        %659 = vrot.lane.b32.xlu0 %v474, 8
        %v660 = vpop.permute.xlu0 %659
        %661 = vrot.lane.b32.xlu0 %v476, 8
        %v662 = vpop.permute.xlu0 %661
        %695 = vrot.lane.b32.xlu0 %v216, 12
        %v696 = vpop.permute.xlu0 %695
        %697 = vrot.lane.b32.xlu0 %v217, 12
        %v698 = vpop.permute.xlu0 %697
        %699 = vrot.lane.b32.xlu0 %v219, 12
        %v700 = vpop.permute.xlu0 %699
        %701 = vrot.lane.b32.xlu0 %v220, 12
        %v702 = vpop.permute.xlu0 %701
        %703 = vrot.lane.b32.xlu0 %v222, 12
        %v704 = vpop.permute.xlu0 %703
        %705 = vrot.lane.b32.xlu0 %v223, 12
        %v706 = vpop.permute.xlu0 %705
        %707 = vrot.lane.b32.xlu0 %v225, 12
        %v708 = vpop.permute.xlu0 %707
        %709 = vrot.lane.b32.xlu0 %v226, 12
        %v710 = vpop.permute.xlu0 %709
        %711 = vrot.lane.b32.xlu0 %v228, 12
        %v712 = vpop.permute.xlu0 %711
        %713 = vrot.lane.b32.xlu0 %v229, 12
        %v714 = vpop.permute.xlu0 %713
        %715 = vrot.lane.b32.xlu0 %v231, 12
        %v716 = vpop.permute.xlu0 %715
        %717 = vrot.lane.b32.xlu0 %v232, 12
        %v718 = vpop.permute.xlu0 %717
        %719 = vrot.lane.b32.xlu0 %v234, 12
        %v720 = vpop.permute.xlu0 %719
        %721 = vrot.lane.b32.xlu0 %v235, 12
        %v722 = vpop.permute.xlu0 %721
        %723 = vrot.lane.b32.xlu0 %v237, 12
        %v724 = vpop.permute.xlu0 %723
        %725 = vrot.lane.b32.xlu0 %v238, 12
        %v726 = vpop.permute.xlu0 %725
        %727 = vrot.lane.b32.xlu0 %v240, 12
        %v728 = vpop.permute.xlu0 %727
        %729 = vrot.lane.b32.xlu0 %v241, 12
        %v730 = vpop.permute.xlu0 %729
        %731 = vrot.lane.b32.xlu0 %v243, 12
        %v732 = vpop.permute.xlu0 %731
        %733 = vrot.lane.b32.xlu0 %v244, 12
        %v734 = vpop.permute.xlu0 %733
        %735 = vrot.lane.b32.xlu0 %v246, 12
        %v736 = vpop.permute.xlu0 %735
        %737 = vrot.lane.b32.xlu0 %v247, 12
        %v738 = vpop.permute.xlu0 %737
        %739 = vrot.lane.b32.xlu0 %v249, 12
        %v740 = vpop.permute.xlu0 %739
        %741 = vrot.lane.b32.xlu0 %v250, 12
        %v742 = vpop.permute.xlu0 %741
        %743 = vrot.lane.b32.xlu0 %v252, 12
        %v744 = vpop.permute.xlu0 %743
        %745 = vrot.lane.b32.xlu0 %v253, 12
        %v746 = vpop.permute.xlu0 %745
        %747 = vrot.lane.b32.xlu0 %v255, 12
        %v748 = vpop.permute.xlu0 %747
        %749 = vrot.lane.b32.xlu0 %v256, 12
        %v750 = vpop.permute.xlu0 %749
        %751 = vrot.lane.b32.xlu0 %v258, 12
        %v752 = vpop.permute.xlu0 %751
        %753 = vrot.lane.b32.xlu0 %v259, 12
        %v754 = vpop.permute.xlu0 %753
        %755 = vrot.lane.b32.xlu0 %v261, 12
        %v756 = vpop.permute.xlu0 %755
        %757 = vrot.lane.b32.xlu0 %v262, 12
        %v758 = vpop.permute.xlu0 %757
        %791 = vrot.lane.b32.xlu0 %v323, 16
        %v792 = vpop.permute.xlu0 %791
        %793 = vrot.lane.b32.xlu0 %v325, 16
        %v794 = vpop.permute.xlu0 %793
        %795 = vrot.lane.b32.xlu0 %v328, 16
        %v796 = vpop.permute.xlu0 %795
        %797 = vrot.lane.b32.xlu0 %v330, 16
        %v798 = vpop.permute.xlu0 %797
        %799 = vrot.lane.b32.xlu0 %v333, 16
        %v800 = vpop.permute.xlu0 %799
        %801 = vrot.lane.b32.xlu0 %v335, 16
        %v802 = vpop.permute.xlu0 %801
        %803 = vrot.lane.b32.xlu0 %v338, 16
        %v804 = vpop.permute.xlu0 %803
        %805 = vrot.lane.b32.xlu0 %v340, 16
        %v806 = vpop.permute.xlu0 %805
        %807 = vrot.lane.b32.xlu0 %v343, 16
        %v808 = vpop.permute.xlu0 %807
        %809 = vrot.lane.b32.xlu0 %v345, 16
        %v810 = vpop.permute.xlu0 %809
        %811 = vrot.lane.b32.xlu0 %v348, 16
        %v812 = vpop.permute.xlu0 %811
        %813 = vrot.lane.b32.xlu0 %v350, 16
        %v814 = vpop.permute.xlu0 %813
        %815 = vrot.lane.b32.xlu0 %v353, 16
        %v816 = vpop.permute.xlu0 %815
        %817 = vrot.lane.b32.xlu0 %v355, 16
        %v818 = vpop.permute.xlu0 %817
        %819 = vrot.lane.b32.xlu0 %v358, 16
        %v820 = vpop.permute.xlu0 %819
        %821 = vrot.lane.b32.xlu0 %v360, 16
        %v822 = vpop.permute.xlu0 %821
        %823 = vrot.lane.b32.xlu0 %v363, 16
        %v824 = vpop.permute.xlu0 %823
        %825 = vrot.lane.b32.xlu0 %v365, 16
        %v826 = vpop.permute.xlu0 %825
        %827 = vrot.lane.b32.xlu0 %v368, 16
        %v828 = vpop.permute.xlu0 %827
        %829 = vrot.lane.b32.xlu0 %v370, 16
        %v830 = vpop.permute.xlu0 %829
        %831 = vrot.lane.b32.xlu0 %v373, 16
        %v832 = vpop.permute.xlu0 %831
        %833 = vrot.lane.b32.xlu0 %v375, 16
        %v834 = vpop.permute.xlu0 %833
        %835 = vrot.lane.b32.xlu0 %v378, 16
        %v836 = vpop.permute.xlu0 %835
        %837 = vrot.lane.b32.xlu0 %v380, 16
        %v838 = vpop.permute.xlu0 %837
        %839 = vrot.lane.b32.xlu0 %v383, 16
        %v840 = vpop.permute.xlu0 %839
        %841 = vrot.lane.b32.xlu0 %v385, 16
        %v842 = vpop.permute.xlu0 %841
        %843 = vrot.lane.b32.xlu0 %v388, 16
        %v844 = vpop.permute.xlu0 %843
        %845 = vrot.lane.b32.xlu0 %v390, 16
        %v846 = vpop.permute.xlu0 %845
        %847 = vrot.lane.b32.xlu0 %v393, 16
        %v848 = vpop.permute.xlu0 %847
        %849 = vrot.lane.b32.xlu0 %v395, 16
        %v850 = vpop.permute.xlu0 %849
        %851 = vrot.lane.b32.xlu0 %v482, 16
        %v852 = vpop.permute.xlu0 %851
        %853 = vrot.lane.b32.xlu0 %v484, 16
        %v854 = vpop.permute.xlu0 %853
        %887 = vrot.lane.b32.xlu0 %v404, 20
        %v888 = vpop.permute.xlu0 %887
        %889 = vrot.lane.b32.xlu0 %v406, 20
        %v890 = vpop.permute.xlu0 %889
        %891 = vrot.lane.b32.xlu0 %v409, 20
        %v892 = vpop.permute.xlu0 %891
        %893 = vrot.lane.b32.xlu0 %v411, 20
        %v894 = vpop.permute.xlu0 %893
        %895 = vrot.lane.b32.xlu0 %v414, 20
        %v896 = vpop.permute.xlu0 %895
        %897 = vrot.lane.b32.xlu0 %v416, 20
        %v898 = vpop.permute.xlu0 %897
        %899 = vrot.lane.b32.xlu0 %v419, 20
        %v900 = vpop.permute.xlu0 %899
        %901 = vrot.lane.b32.xlu0 %v421, 20
        %v902 = vpop.permute.xlu0 %901
        %903 = vrot.lane.b32.xlu0 %v424, 20
        %v904 = vpop.permute.xlu0 %903
        %905 = vrot.lane.b32.xlu0 %v426, 20
        %v906 = vpop.permute.xlu0 %905
        %907 = vrot.lane.b32.xlu0 %v429, 20
        %v908 = vpop.permute.xlu0 %907
        %909 = vrot.lane.b32.xlu0 %v431, 20
        %v910 = vpop.permute.xlu0 %909
        %911 = vrot.lane.b32.xlu0 %v434, 20
        %v912 = vpop.permute.xlu0 %911
        %913 = vrot.lane.b32.xlu0 %v436, 20
        %v914 = vpop.permute.xlu0 %913
        %915 = vrot.lane.b32.xlu0 %v439, 20
        %v916 = vpop.permute.xlu0 %915
        %917 = vrot.lane.b32.xlu0 %v441, 20
        %v918 = vpop.permute.xlu0 %917
        %919 = vrot.lane.b32.xlu0 %v444, 20
        %v920 = vpop.permute.xlu0 %919
        %921 = vrot.lane.b32.xlu0 %v446, 20
        %v922 = vpop.permute.xlu0 %921
        %923 = vrot.lane.b32.xlu0 %v449, 20
        %v924 = vpop.permute.xlu0 %923
        %925 = vrot.lane.b32.xlu0 %v451, 20
        %v926 = vpop.permute.xlu0 %925
        %927 = vrot.lane.b32.xlu0 %v454, 20
        %v928 = vpop.permute.xlu0 %927
        %929 = vrot.lane.b32.xlu0 %v456, 20
        %v930 = vpop.permute.xlu0 %929
        %931 = vrot.lane.b32.xlu0 %v459, 20
        %v932 = vpop.permute.xlu0 %931
        %933 = vrot.lane.b32.xlu0 %v461, 20
        %v934 = vpop.permute.xlu0 %933
        %935 = vrot.lane.b32.xlu0 %v464, 20
        %v936 = vpop.permute.xlu0 %935
        %937 = vrot.lane.b32.xlu0 %v466, 20
        %v938 = vpop.permute.xlu0 %937
        %939 = vrot.lane.b32.xlu0 %v469, 20
        %v940 = vpop.permute.xlu0 %939
        %941 = vrot.lane.b32.xlu0 %v471, 20
        %v942 = vpop.permute.xlu0 %941
        %943 = vrot.lane.b32.xlu0 %v474, 20
        %v944 = vpop.permute.xlu0 %943
        %945 = vrot.lane.b32.xlu0 %v476, 20
        %v946 = vpop.permute.xlu0 %945
        %947 = vrot.lane.b32.xlu0 %v487, 20
        %v948 = vpop.permute.xlu0 %947
        %949 = vrot.lane.b32.xlu0 %v489, 20
        %v950 = vpop.permute.xlu0 %949
        %983 = vrot.lane.b32.xlu0 %v219, 24
        %v984 = vpop.permute.xlu0 %983
        %985 = vrot.lane.b32.xlu0 %v220, 24
        %v986 = vpop.permute.xlu0 %985
        %987 = vrot.lane.b32.xlu0 %v222, 24
        %v988 = vpop.permute.xlu0 %987
        %989 = vrot.lane.b32.xlu0 %v223, 24
        %v990 = vpop.permute.xlu0 %989
        %991 = vrot.lane.b32.xlu0 %v225, 24
        %v992 = vpop.permute.xlu0 %991
        %993 = vrot.lane.b32.xlu0 %v226, 24
        %v994 = vpop.permute.xlu0 %993
        %995 = vrot.lane.b32.xlu0 %v228, 24
        %v996 = vpop.permute.xlu0 %995
        %997 = vrot.lane.b32.xlu0 %v229, 24
        %v998 = vpop.permute.xlu0 %997
        %999 = vrot.lane.b32.xlu0 %v231, 24
        %v1000 = vpop.permute.xlu0 %999
        %1001 = vrot.lane.b32.xlu0 %v232, 24
        %v1002 = vpop.permute.xlu0 %1001
        %1003 = vrot.lane.b32.xlu0 %v234, 24
        %v1004 = vpop.permute.xlu0 %1003
        %1005 = vrot.lane.b32.xlu0 %v235, 24
        %v1006 = vpop.permute.xlu0 %1005
        %1007 = vrot.lane.b32.xlu0 %v237, 24
        %v1008 = vpop.permute.xlu0 %1007
        %1009 = vrot.lane.b32.xlu0 %v238, 24
        %v1010 = vpop.permute.xlu0 %1009
        %1011 = vrot.lane.b32.xlu0 %v240, 24
        %v1012 = vpop.permute.xlu0 %1011
        %1013 = vrot.lane.b32.xlu0 %v241, 24
        %v1014 = vpop.permute.xlu0 %1013
        %1015 = vrot.lane.b32.xlu0 %v243, 24
        %v1016 = vpop.permute.xlu0 %1015
        %1017 = vrot.lane.b32.xlu0 %v244, 24
        %v1018 = vpop.permute.xlu0 %1017
        %1019 = vrot.lane.b32.xlu0 %v246, 24
        %v1020 = vpop.permute.xlu0 %1019
        %1021 = vrot.lane.b32.xlu0 %v247, 24
        %v1022 = vpop.permute.xlu0 %1021
        %1023 = vrot.lane.b32.xlu0 %v249, 24
        %v1024 = vpop.permute.xlu0 %1023
        %1025 = vrot.lane.b32.xlu0 %v250, 24
        %v1026 = vpop.permute.xlu0 %1025
        %1027 = vrot.lane.b32.xlu0 %v252, 24
        %v1028 = vpop.permute.xlu0 %1027
        %1029 = vrot.lane.b32.xlu0 %v253, 24
        %v1030 = vpop.permute.xlu0 %1029
        %1031 = vrot.lane.b32.xlu0 %v255, 24
        %v1032 = vpop.permute.xlu0 %1031
        %1033 = vrot.lane.b32.xlu0 %v256, 24
        %v1034 = vpop.permute.xlu0 %1033
        %1035 = vrot.lane.b32.xlu0 %v258, 24
        %v1036 = vpop.permute.xlu0 %1035
        %1037 = vrot.lane.b32.xlu0 %v259, 24
        %v1038 = vpop.permute.xlu0 %1037
        %1039 = vrot.lane.b32.xlu0 %v261, 24
        %v1040 = vpop.permute.xlu0 %1039
        %1041 = vrot.lane.b32.xlu0 %v262, 24
        %v1042 = vpop.permute.xlu0 %1041
        %1043 = vrot.lane.b32.xlu0 %v264, 24
        %v1044 = vpop.permute.xlu0 %1043
        %1045 = vrot.lane.b32.xlu0 %v265, 24
        %v1046 = vpop.permute.xlu0 %1045
        %1079 = vrot.lane.b32.xlu0 %v328, 28
        %v1080 = vpop.permute.xlu0 %1079
        %1081 = vrot.lane.b32.xlu0 %v330, 28
        %v1082 = vpop.permute.xlu0 %1081
        %1083 = vrot.lane.b32.xlu0 %v333, 28
        %v1084 = vpop.permute.xlu0 %1083
        %1085 = vrot.lane.b32.xlu0 %v335, 28
        %v1086 = vpop.permute.xlu0 %1085
        %1087 = vrot.lane.b32.xlu0 %v338, 28
        %v1088 = vpop.permute.xlu0 %1087
        %1089 = vrot.lane.b32.xlu0 %v340, 28
        %v1090 = vpop.permute.xlu0 %1089
        %1091 = vrot.lane.b32.xlu0 %v343, 28
        %v1092 = vpop.permute.xlu0 %1091
        %1093 = vrot.lane.b32.xlu0 %v345, 28
        %v1094 = vpop.permute.xlu0 %1093
        %1095 = vrot.lane.b32.xlu0 %v348, 28
        %v1096 = vpop.permute.xlu0 %1095
        %1097 = vrot.lane.b32.xlu0 %v350, 28
        %v1098 = vpop.permute.xlu0 %1097
        %1099 = vrot.lane.b32.xlu0 %v353, 28
        %v1100 = vpop.permute.xlu0 %1099
        %1101 = vrot.lane.b32.xlu0 %v355, 28
        %v1102 = vpop.permute.xlu0 %1101
        %1103 = vrot.lane.b32.xlu0 %v358, 28
        %v1104 = vpop.permute.xlu0 %1103
        %1105 = vrot.lane.b32.xlu0 %v360, 28
        %v1106 = vpop.permute.xlu0 %1105
        %1107 = vrot.lane.b32.xlu0 %v363, 28
        %v1108 = vpop.permute.xlu0 %1107
        %1109 = vrot.lane.b32.xlu0 %v365, 28
        %v1110 = vpop.permute.xlu0 %1109
        %1111 = vrot.lane.b32.xlu0 %v368, 28
        %v1112 = vpop.permute.xlu0 %1111
        %1113 = vrot.lane.b32.xlu0 %v370, 28
        %v1114 = vpop.permute.xlu0 %1113
        %1115 = vrot.lane.b32.xlu0 %v373, 28
        %v1116 = vpop.permute.xlu0 %1115
        %1117 = vrot.lane.b32.xlu0 %v375, 28
        %v1118 = vpop.permute.xlu0 %1117
        %1119 = vrot.lane.b32.xlu0 %v378, 28
        %v1120 = vpop.permute.xlu0 %1119
        %1121 = vrot.lane.b32.xlu0 %v380, 28
        %v1122 = vpop.permute.xlu0 %1121
        %1123 = vrot.lane.b32.xlu0 %v383, 28
        %v1124 = vpop.permute.xlu0 %1123
        %1125 = vrot.lane.b32.xlu0 %v385, 28
        %v1126 = vpop.permute.xlu0 %1125
        %1127 = vrot.lane.b32.xlu0 %v388, 28
        %v1128 = vpop.permute.xlu0 %1127
        %1129 = vrot.lane.b32.xlu0 %v390, 28
        %v1130 = vpop.permute.xlu0 %1129
        %1131 = vrot.lane.b32.xlu0 %v393, 28
        %v1132 = vpop.permute.xlu0 %1131
        %1133 = vrot.lane.b32.xlu0 %v395, 28
        %v1134 = vpop.permute.xlu0 %1133
        %1135 = vrot.lane.b32.xlu0 %v482, 28
        %v1136 = vpop.permute.xlu0 %1135
        %1137 = vrot.lane.b32.xlu0 %v484, 28
        %v1138 = vpop.permute.xlu0 %1137
        %1139 = vrot.lane.b32.xlu0 %v495, 28
        %v1140 = vpop.permute.xlu0 %1139
        %1141 = vrot.lane.b32.xlu0 %v497, 28
        %v1142 = vpop.permute.xlu0 %1141
        %1175 = vrot.lane.b32.xlu0 %v409, 32
        %v1176 = vpop.permute.xlu0 %1175
        %1177 = vrot.lane.b32.xlu0 %v411, 32
        %v1178 = vpop.permute.xlu0 %1177
        %1179 = vrot.lane.b32.xlu0 %v414, 32
        %v1180 = vpop.permute.xlu0 %1179
        %1181 = vrot.lane.b32.xlu0 %v416, 32
        %v1182 = vpop.permute.xlu0 %1181
        %1183 = vrot.lane.b32.xlu0 %v419, 32
        %v1184 = vpop.permute.xlu0 %1183
        %1185 = vrot.lane.b32.xlu0 %v421, 32
        %v1186 = vpop.permute.xlu0 %1185
        %1187 = vrot.lane.b32.xlu0 %v424, 32
        %v1188 = vpop.permute.xlu0 %1187
        %1189 = vrot.lane.b32.xlu0 %v426, 32
        %v1190 = vpop.permute.xlu0 %1189
        %1191 = vrot.lane.b32.xlu0 %v429, 32
        %v1192 = vpop.permute.xlu0 %1191
        %1193 = vrot.lane.b32.xlu0 %v431, 32
        %v1194 = vpop.permute.xlu0 %1193
        %1195 = vrot.lane.b32.xlu0 %v434, 32
        %v1196 = vpop.permute.xlu0 %1195
        %1197 = vrot.lane.b32.xlu0 %v436, 32
        %v1198 = vpop.permute.xlu0 %1197
        %1199 = vrot.lane.b32.xlu0 %v439, 32
        %v1200 = vpop.permute.xlu0 %1199
        %1201 = vrot.lane.b32.xlu0 %v441, 32
        %v1202 = vpop.permute.xlu0 %1201
        %1203 = vrot.lane.b32.xlu0 %v444, 32
        %v1204 = vpop.permute.xlu0 %1203
        %1205 = vrot.lane.b32.xlu0 %v446, 32
        %v1206 = vpop.permute.xlu0 %1205
        %1207 = vrot.lane.b32.xlu0 %v449, 32
        %v1208 = vpop.permute.xlu0 %1207
        %1209 = vrot.lane.b32.xlu0 %v451, 32
        %v1210 = vpop.permute.xlu0 %1209
        %1211 = vrot.lane.b32.xlu0 %v454, 32
        %v1212 = vpop.permute.xlu0 %1211
        %1213 = vrot.lane.b32.xlu0 %v456, 32
        %v1214 = vpop.permute.xlu0 %1213
        %1215 = vrot.lane.b32.xlu0 %v459, 32
        %v1216 = vpop.permute.xlu0 %1215
        %1217 = vrot.lane.b32.xlu0 %v461, 32
        %v1218 = vpop.permute.xlu0 %1217
        %1219 = vrot.lane.b32.xlu0 %v464, 32
        %v1220 = vpop.permute.xlu0 %1219
        %1221 = vrot.lane.b32.xlu0 %v466, 32
        %v1222 = vpop.permute.xlu0 %1221
        %1223 = vrot.lane.b32.xlu0 %v469, 32
        %v1224 = vpop.permute.xlu0 %1223
        %1225 = vrot.lane.b32.xlu0 %v471, 32
        %v1226 = vpop.permute.xlu0 %1225
        %1227 = vrot.lane.b32.xlu0 %v474, 32
        %v1228 = vpop.permute.xlu0 %1227
        %1229 = vrot.lane.b32.xlu0 %v476, 32
        %v1230 = vpop.permute.xlu0 %1229
        %1231 = vrot.lane.b32.xlu0 %v487, 32
        %v1232 = vpop.permute.xlu0 %1231
        %1233 = vrot.lane.b32.xlu0 %v489, 32
        %v1234 = vpop.permute.xlu0 %1233
        %1235 = vrot.lane.b32.xlu0 %v500, 32
        %v1236 = vpop.permute.xlu0 %1235
        %1237 = vrot.lane.b32.xlu0 %v502, 32
        %v1238 = vpop.permute.xlu0 %1237
        %vm1271 = vcmask 31744
        %v1272 = vsel %vm1271, %v213, %v504
        %v1273 = vsel %vm1271, %v214, %v506
        %v1274 = vsel %vm1271, %v216, %v508
        %v1275 = vsel %vm1271, %v217, %v510
        %v1276 = vsel %vm1271, %v219, %v512
        %v1277 = vsel %vm1271, %v220, %v514
        %v1278 = vsel %vm1271, %v222, %v516
        %v1279 = vsel %vm1271, %v223, %v518
        %v1280 = vsel %vm1271, %v225, %v520
        %v1281 = vsel %vm1271, %v226, %v522
        %v1282 = vsel %vm1271, %v228, %v524
        %v1283 = vsel %vm1271, %v229, %v526
        %v1284 = vsel %vm1271, %v231, %v528
        %v1285 = vsel %vm1271, %v232, %v530
        %v1286 = vsel %vm1271, %v234, %v532
        %v1287 = vsel %vm1271, %v235, %v534
        %v1288 = vsel %vm1271, %v237, %v536
        %v1289 = vsel %vm1271, %v238, %v538
        %v1290 = vsel %vm1271, %v240, %v540
        %v1291 = vsel %vm1271, %v241, %v542
        %v1292 = vsel %vm1271, %v243, %v544
        %v1293 = vsel %vm1271, %v244, %v546
        %v1294 = vsel %vm1271, %v246, %v548
        %v1295 = vsel %vm1271, %v247, %v550
        %v1296 = vsel %vm1271, %v249, %v552
        %v1297 = vsel %vm1271, %v250, %v554
        %v1298 = vsel %vm1271, %v252, %v556
        %v1299 = vsel %vm1271, %v253, %v558
        %v1300 = vsel %vm1271, %v255, %v560
        %v1301 = vsel %vm1271, %v256, %v562
        %v1302 = vsel %vm1271, %v258, %v564
        %v1303 = vsel %vm1271, %v259, %v566
        %vm1304 = vcmask 64512
        %v1305 = vsel %vm1304, %v1272, %v600
        %v1306 = vsel %vm1304, %v1273, %v602
        %v1307 = vsel %vm1304, %v1274, %v604
        %v1308 = vsel %vm1304, %v1275, %v606
        %v1309 = vsel %vm1304, %v1276, %v608
        %v1310 = vsel %vm1304, %v1277, %v610
        %v1311 = vsel %vm1304, %v1278, %v612
        %v1312 = vsel %vm1304, %v1279, %v614
        %v1313 = vsel %vm1304, %v1280, %v616
        %v1314 = vsel %vm1304, %v1281, %v618
        %v1315 = vsel %vm1304, %v1282, %v620
        %v1316 = vsel %vm1304, %v1283, %v622
        %v1317 = vsel %vm1304, %v1284, %v624
        %v1318 = vsel %vm1304, %v1285, %v626
        %v1319 = vsel %vm1304, %v1286, %v628
        %v1320 = vsel %vm1304, %v1287, %v630
        %v1321 = vsel %vm1304, %v1288, %v632
        %v1322 = vsel %vm1304, %v1289, %v634
        %v1323 = vsel %vm1304, %v1290, %v636
        %v1324 = vsel %vm1304, %v1291, %v638
        %v1325 = vsel %vm1304, %v1292, %v640
        %v1326 = vsel %vm1304, %v1293, %v642
        %v1327 = vsel %vm1304, %v1294, %v644
        %v1328 = vsel %vm1304, %v1295, %v646
        %v1329 = vsel %vm1304, %v1296, %v648
        %v1330 = vsel %vm1304, %v1297, %v650
        %v1331 = vsel %vm1304, %v1298, %v652
        %v1332 = vsel %vm1304, %v1299, %v654
        %v1333 = vsel %vm1304, %v1300, %v656
        %v1334 = vsel %vm1304, %v1301, %v658
        %v1335 = vsel %vm1304, %v1302, %v660
        %v1336 = vsel %vm1304, %v1303, %v662
        %vm1337 = vcmask 97280
        %v1338 = vsel %vm1337, %v1305, %v696
        %v1339 = vsel %vm1337, %v1306, %v698
        %v1340 = vsel %vm1337, %v1307, %v700
        %v1341 = vsel %vm1337, %v1308, %v702
        %v1342 = vsel %vm1337, %v1309, %v704
        %v1343 = vsel %vm1337, %v1310, %v706
        %v1344 = vsel %vm1337, %v1311, %v708
        %v1345 = vsel %vm1337, %v1312, %v710
        %v1346 = vsel %vm1337, %v1313, %v712
        %v1347 = vsel %vm1337, %v1314, %v714
        %v1348 = vsel %vm1337, %v1315, %v716
        %v1349 = vsel %vm1337, %v1316, %v718
        %v1350 = vsel %vm1337, %v1317, %v720
        %v1351 = vsel %vm1337, %v1318, %v722
        %v1352 = vsel %vm1337, %v1319, %v724
        %v1353 = vsel %vm1337, %v1320, %v726
        %v1354 = vsel %vm1337, %v1321, %v728
        %v1355 = vsel %vm1337, %v1322, %v730
        %v1356 = vsel %vm1337, %v1323, %v732
        %v1357 = vsel %vm1337, %v1324, %v734
        %v1358 = vsel %vm1337, %v1325, %v736
        %v1359 = vsel %vm1337, %v1326, %v738
        %v1360 = vsel %vm1337, %v1327, %v740
        %v1361 = vsel %vm1337, %v1328, %v742
        %v1362 = vsel %vm1337, %v1329, %v744
        %v1363 = vsel %vm1337, %v1330, %v746
        %v1364 = vsel %vm1337, %v1331, %v748
        %v1365 = vsel %vm1337, %v1332, %v750
        %v1366 = vsel %vm1337, %v1333, %v752
        %v1367 = vsel %vm1337, %v1334, %v754
        %v1368 = vsel %vm1337, %v1335, %v756
        %v1369 = vsel %vm1337, %v1336, %v758
        %vm1370 = vcmask 130048
        %v1371 = vsel %vm1370, %v1338, %v792
        %v1372 = vsel %vm1370, %v1339, %v794
        %v1373 = vsel %vm1370, %v1340, %v796
        %v1374 = vsel %vm1370, %v1341, %v798
        %v1375 = vsel %vm1370, %v1342, %v800
        %v1376 = vsel %vm1370, %v1343, %v802
        %v1377 = vsel %vm1370, %v1344, %v804
        %v1378 = vsel %vm1370, %v1345, %v806
        %v1379 = vsel %vm1370, %v1346, %v808
        %v1380 = vsel %vm1370, %v1347, %v810
        %v1381 = vsel %vm1370, %v1348, %v812
        %v1382 = vsel %vm1370, %v1349, %v814
        %v1383 = vsel %vm1370, %v1350, %v816
        %v1384 = vsel %vm1370, %v1351, %v818
        %v1385 = vsel %vm1370, %v1352, %v820
        %v1386 = vsel %vm1370, %v1353, %v822
        %v1387 = vsel %vm1370, %v1354, %v824
        %v1388 = vsel %vm1370, %v1355, %v826
        %v1389 = vsel %vm1370, %v1356, %v828
        %v1390 = vsel %vm1370, %v1357, %v830
        %v1391 = vsel %vm1370, %v1358, %v832
        %v1392 = vsel %vm1370, %v1359, %v834
        %v1393 = vsel %vm1370, %v1360, %v836
        %v1394 = vsel %vm1370, %v1361, %v838
        %v1395 = vsel %vm1370, %v1362, %v840
        %v1396 = vsel %vm1370, %v1363, %v842
        %v1397 = vsel %vm1370, %v1364, %v844
        %v1398 = vsel %vm1370, %v1365, %v846
        %v1399 = vsel %vm1370, %v1366, %v848
        %v1400 = vsel %vm1370, %v1367, %v850
        %v1401 = vsel %vm1370, %v1368, %v852
        %v1402 = vsel %vm1370, %v1369, %v854
        %vm1403 = vcmask 162816
        %v1404 = vsel %vm1403, %v1371, %v888
        %v1405 = vsel %vm1403, %v1372, %v890
        %v1406 = vsel %vm1403, %v1373, %v892
        %v1407 = vsel %vm1403, %v1374, %v894
        %v1408 = vsel %vm1403, %v1375, %v896
        %v1409 = vsel %vm1403, %v1376, %v898
        %v1410 = vsel %vm1403, %v1377, %v900
        %v1411 = vsel %vm1403, %v1378, %v902
        %v1412 = vsel %vm1403, %v1379, %v904
        %v1413 = vsel %vm1403, %v1380, %v906
        %v1414 = vsel %vm1403, %v1381, %v908
        %v1415 = vsel %vm1403, %v1382, %v910
        %v1416 = vsel %vm1403, %v1383, %v912
        %v1417 = vsel %vm1403, %v1384, %v914
        %v1418 = vsel %vm1403, %v1385, %v916
        %v1419 = vsel %vm1403, %v1386, %v918
        %v1420 = vsel %vm1403, %v1387, %v920
        %v1421 = vsel %vm1403, %v1388, %v922
        %v1422 = vsel %vm1403, %v1389, %v924
        %v1423 = vsel %vm1403, %v1390, %v926
        %v1424 = vsel %vm1403, %v1391, %v928
        %v1425 = vsel %vm1403, %v1392, %v930
        %v1426 = vsel %vm1403, %v1393, %v932
        %v1427 = vsel %vm1403, %v1394, %v934
        %v1428 = vsel %vm1403, %v1395, %v936
        %v1429 = vsel %vm1403, %v1396, %v938
        %v1430 = vsel %vm1403, %v1397, %v940
        %v1431 = vsel %vm1403, %v1398, %v942
        %v1432 = vsel %vm1403, %v1399, %v944
        %v1433 = vsel %vm1403, %v1400, %v946
        %v1434 = vsel %vm1403, %v1401, %v948
        %v1435 = vsel %vm1403, %v1402, %v950
        %vm1436 = vcmask 195584
        %v1437 = vsel %vm1436, %v1404, %v984
        %v1438 = vsel %vm1436, %v1405, %v986
        %v1439 = vsel %vm1436, %v1406, %v988
        %v1440 = vsel %vm1436, %v1407, %v990
        %v1441 = vsel %vm1436, %v1408, %v992
        %v1442 = vsel %vm1436, %v1409, %v994
        %v1443 = vsel %vm1436, %v1410, %v996
        %v1444 = vsel %vm1436, %v1411, %v998
        %v1445 = vsel %vm1436, %v1412, %v1000
        %v1446 = vsel %vm1436, %v1413, %v1002
        %v1447 = vsel %vm1436, %v1414, %v1004
        %v1448 = vsel %vm1436, %v1415, %v1006
        %v1449 = vsel %vm1436, %v1416, %v1008
        %v1450 = vsel %vm1436, %v1417, %v1010
        %v1451 = vsel %vm1436, %v1418, %v1012
        %v1452 = vsel %vm1436, %v1419, %v1014
        %v1453 = vsel %vm1436, %v1420, %v1016
        %v1454 = vsel %vm1436, %v1421, %v1018
        %v1455 = vsel %vm1436, %v1422, %v1020
        %v1456 = vsel %vm1436, %v1423, %v1022
        %v1457 = vsel %vm1436, %v1424, %v1024
        %v1458 = vsel %vm1436, %v1425, %v1026
        %v1459 = vsel %vm1436, %v1426, %v1028
        %v1460 = vsel %vm1436, %v1427, %v1030
        %v1461 = vsel %vm1436, %v1428, %v1032
        %v1462 = vsel %vm1436, %v1429, %v1034
        %v1463 = vsel %vm1436, %v1430, %v1036
        %v1464 = vsel %vm1436, %v1431, %v1038
        %v1465 = vsel %vm1436, %v1432, %v1040
        %v1466 = vsel %vm1436, %v1433, %v1042
        %v1467 = vsel %vm1436, %v1434, %v1044
        %v1468 = vsel %vm1436, %v1435, %v1046
        %vm1469 = vcmask 228352
        %v1470 = vsel %vm1469, %v1437, %v1080
        %v1471 = vsel %vm1469, %v1438, %v1082
        %v1472 = vsel %vm1469, %v1439, %v1084
        %v1473 = vsel %vm1469, %v1440, %v1086
        %v1474 = vsel %vm1469, %v1441, %v1088
        %v1475 = vsel %vm1469, %v1442, %v1090
        %v1476 = vsel %vm1469, %v1443, %v1092
        %v1477 = vsel %vm1469, %v1444, %v1094
        %v1478 = vsel %vm1469, %v1445, %v1096
        %v1479 = vsel %vm1469, %v1446, %v1098
        %v1480 = vsel %vm1469, %v1447, %v1100
        %v1481 = vsel %vm1469, %v1448, %v1102
        %v1482 = vsel %vm1469, %v1449, %v1104
        %v1483 = vsel %vm1469, %v1450, %v1106
        %v1484 = vsel %vm1469, %v1451, %v1108
        %v1485 = vsel %vm1469, %v1452, %v1110
        %v1486 = vsel %vm1469, %v1453, %v1112
        %v1487 = vsel %vm1469, %v1454, %v1114
        %v1488 = vsel %vm1469, %v1455, %v1116
        %v1489 = vsel %vm1469, %v1456, %v1118
        %v1490 = vsel %vm1469, %v1457, %v1120
        %v1491 = vsel %vm1469, %v1458, %v1122
        %v1492 = vsel %vm1469, %v1459, %v1124
        %v1493 = vsel %vm1469, %v1460, %v1126
        %v1494 = vsel %vm1469, %v1461, %v1128
        %v1495 = vsel %vm1469, %v1462, %v1130
        %v1496 = vsel %vm1469, %v1463, %v1132
        %v1497 = vsel %vm1469, %v1464, %v1134
        %v1498 = vsel %vm1469, %v1465, %v1136
        %v1499 = vsel %vm1469, %v1466, %v1138
        %v1500 = vsel %vm1469, %v1467, %v1140
        %v1501 = vsel %vm1469, %v1468, %v1142
        %vm1502 = vcmask 261120
        %v1503 = vsel %vm1502, %v1470, %v1176
        %v1504 = vsel %vm1502, %v1471, %v1178
        %v1505 = vsel %vm1502, %v1472, %v1180
        %v1506 = vsel %vm1502, %v1473, %v1182
        %v1507 = vsel %vm1502, %v1474, %v1184
        %v1508 = vsel %vm1502, %v1475, %v1186
        %v1509 = vsel %vm1502, %v1476, %v1188
        %v1510 = vsel %vm1502, %v1477, %v1190
        %v1511 = vsel %vm1502, %v1478, %v1192
        %v1512 = vsel %vm1502, %v1479, %v1194
        %v1513 = vsel %vm1502, %v1480, %v1196
        %v1514 = vsel %vm1502, %v1481, %v1198
        %v1515 = vsel %vm1502, %v1482, %v1200
        %v1516 = vsel %vm1502, %v1483, %v1202
        %v1517 = vsel %vm1502, %v1484, %v1204
        %v1518 = vsel %vm1502, %v1485, %v1206
        %v1519 = vsel %vm1502, %v1486, %v1208
        %v1520 = vsel %vm1502, %v1487, %v1210
        %v1521 = vsel %vm1502, %v1488, %v1212
        %v1522 = vsel %vm1502, %v1489, %v1214
        %v1523 = vsel %vm1502, %v1490, %v1216
        %v1524 = vsel %vm1502, %v1491, %v1218
        %v1525 = vsel %vm1502, %v1492, %v1220
        %v1526 = vsel %vm1502, %v1493, %v1222
        %v1527 = vsel %vm1502, %v1494, %v1224
        %v1528 = vsel %vm1502, %v1495, %v1226
        %v1529 = vsel %vm1502, %v1496, %v1228
        %v1530 = vsel %vm1502, %v1497, %v1230
        %v1531 = vsel %vm1502, %v1498, %v1232
        %v1532 = vsel %vm1502, %v1499, %v1234
        %v1533 = vsel %vm1502, %v1500, %v1236
        %v1534 = vsel %vm1502, %v1501, %v1238
        %v1535 = vld [vmem:[%s212] sm:$0xff]
        %v1536 = vld [vmem:[%s212 + $0x8] sm:$0xff]
        %v1537 = vld [vmem:[%s212 + $0x10] sm:$0xff]
        %v1538 = vld [vmem:[%s212 + $0x18] sm:$0xff]
        %v1539 = vld [vmem:[%s212 + $0x20] sm:$0xf]
        %vm1540 = vcmask 293888
        %v1542 = vsel %vm1540, %v1503, 0
        %v1545 = vsel %vm1540, %v1504, 0
        %v1548 = vsel %vm1540, %v1505, 0
        %v1551 = vsel %vm1540, %v1506, 0
        %v1554 = vsel %vm1540, %v1507, 0
        %v1557 = vsel %vm1540, %v1508, 0
        %v1560 = vsel %vm1540, %v1509, 0
        %v1563 = vsel %vm1540, %v1510, 0
        %v1566 = vsel %vm1540, %v1511, 0
        %v1569 = vsel %vm1540, %v1512, 0
        %v1572 = vsel %vm1540, %v1513, 0
        %v1575 = vsel %vm1540, %v1514, 0
        %v1578 = vsel %vm1540, %v1515, 0
        %v1581 = vsel %vm1540, %v1516, 0
        %v1584 = vsel %vm1540, %v1517, 0
        %v1587 = vsel %vm1540, %v1518, 0
        %v1590 = vsel %vm1540, %v1519, 0
        %v1593 = vsel %vm1540, %v1520, 0
        %v1596 = vsel %vm1540, %v1521, 0
        %v1599 = vsel %vm1540, %v1522, 0
        %v1602 = vsel %vm1540, %v1523, 0
        %v1605 = vsel %vm1540, %v1524, 0
        %v1608 = vsel %vm1540, %v1525, 0
        %v1611 = vsel %vm1540, %v1526, 0
        %v1614 = vsel %vm1540, %v1527, 0
        %v1617 = vsel %vm1540, %v1528, 0
        %v1620 = vsel %vm1540, %v1529, 0
        %v1623 = vsel %vm1540, %v1530, 0
        %v1626 = vsel %vm1540, %v1531, 0
        %v1629 = vsel %vm1540, %v1532, 0
        %v1632 = vsel %vm1540, %v1533, 0
        %v1635 = vsel %vm1540, %v1534, 0
        %vm1637 = vcmask 1043456
        %v1639 = vsel %vm1637, %v1539, 0
        %1641 = vmatpush.msra.mxu0 0.0
        %1642 = vmatpush.msra.mxu0 0.0
        %1643 = vmatpush.msra.mxu0 0.0
        %1644 = vmatpush.msra.mxu0 0.0
        %1645 = vmatpush.msra.mxu0 0.0
        %1646 = vmatpush.msra.mxu0 0.0
        %1647 = vmatpush.msra.mxu0 0.0
        %1648 = vmatpush.msra.mxu0 0.0
        %1649 = vmatpush.msra.mxu0 0.0
        %1650 = vmatpush.msra.mxu0 0.0
        %1651 = vmatpush.msra.mxu0 0.0
        %1652 = vmatpush.msra.mxu0 %v1639
        %1653 = vmatpush.msra.mxu0 %v1538
        %1654 = vmatpush.msra.mxu0 %v1537
        %1655 = vmatpush.msra.mxu0 %v1536
        %1656 = vmatpush.msra.mxu0 %v1535
        %1657 = vmatmul.f32.gmra.mxu0 %v1542
        %v1658 = vpop.f32.mrf.mxu0
        %v1659 = vadd.f32 0.0, %v1658
        %1660 = vmatmul.f32.gmra.mxu0 %v1545
        %v1661 = vpop.f32.mrf.mxu0
        %v1662 = vadd.f32 0.0, %v1661
        %1663 = vmatmul.f32.gmra.mxu0 %v1548
        %v1664 = vpop.f32.mrf.mxu0
        %v1665 = vadd.f32 0.0, %v1664
        %1666 = vmatmul.f32.gmra.mxu0 %v1551
        %v1667 = vpop.f32.mrf.mxu0
        %v1668 = vadd.f32 0.0, %v1667
        %1669 = vmatmul.f32.gmra.mxu0 %v1554
        %v1670 = vpop.f32.mrf.mxu0
        %v1671 = vadd.f32 0.0, %v1670
        %1672 = vmatmul.f32.gmra.mxu0 %v1557
        %v1673 = vpop.f32.mrf.mxu0
        %v1674 = vadd.f32 0.0, %v1673
        %1675 = vmatmul.f32.gmra.mxu0 %v1560
        %v1676 = vpop.f32.mrf.mxu0
        %v1677 = vadd.f32 0.0, %v1676
        %1678 = vmatmul.f32.gmra.mxu0 %v1563
        %v1679 = vpop.f32.mrf.mxu0
        %v1680 = vadd.f32 0.0, %v1679
        %1681 = vmatmul.f32.gmra.mxu0 %v1566
        %v1682 = vpop.f32.mrf.mxu0
        %v1683 = vadd.f32 0.0, %v1682
        %1684 = vmatmul.f32.gmra.mxu0 %v1569
        %v1685 = vpop.f32.mrf.mxu0
        %v1686 = vadd.f32 0.0, %v1685
        %1687 = vmatmul.f32.gmra.mxu0 %v1572
        %v1688 = vpop.f32.mrf.mxu0
        %v1689 = vadd.f32 0.0, %v1688
        %1690 = vmatmul.f32.gmra.mxu0 %v1575
        %v1691 = vpop.f32.mrf.mxu0
        %v1692 = vadd.f32 0.0, %v1691
        %1693 = vmatmul.f32.gmra.mxu0 %v1578
        %v1694 = vpop.f32.mrf.mxu0
        %v1695 = vadd.f32 0.0, %v1694
        %1696 = vmatmul.f32.gmra.mxu0 %v1581
        %v1697 = vpop.f32.mrf.mxu0
        %v1698 = vadd.f32 0.0, %v1697
        %1699 = vmatmul.f32.gmra.mxu0 %v1584
        %v1700 = vpop.f32.mrf.mxu0
        %v1701 = vadd.f32 0.0, %v1700
        %1702 = vmatmul.f32.gmra.mxu0 %v1587
        %v1703 = vpop.f32.mrf.mxu0
        %v1704 = vadd.f32 0.0, %v1703
        %1705 = vmatmul.f32.gmra.mxu0 %v1590
        %v1706 = vpop.f32.mrf.mxu0
        %v1707 = vadd.f32 0.0, %v1706
        %1708 = vmatmul.f32.gmra.mxu0 %v1593
        %v1709 = vpop.f32.mrf.mxu0
        %v1710 = vadd.f32 0.0, %v1709
        %1711 = vmatmul.f32.gmra.mxu0 %v1596
        %v1712 = vpop.f32.mrf.mxu0
        %v1713 = vadd.f32 0.0, %v1712
        %1714 = vmatmul.f32.gmra.mxu0 %v1599
        %v1715 = vpop.f32.mrf.mxu0
        %v1716 = vadd.f32 0.0, %v1715
        %1717 = vmatmul.f32.gmra.mxu0 %v1602
        %v1718 = vpop.f32.mrf.mxu0
        %v1719 = vadd.f32 0.0, %v1718
        %1720 = vmatmul.f32.gmra.mxu0 %v1605
        %v1721 = vpop.f32.mrf.mxu0
        %v1722 = vadd.f32 0.0, %v1721
        %1723 = vmatmul.f32.gmra.mxu0 %v1608
        %v1724 = vpop.f32.mrf.mxu0
        %v1725 = vadd.f32 0.0, %v1724
        %1726 = vmatmul.f32.gmra.mxu0 %v1611
        %v1727 = vpop.f32.mrf.mxu0
        %v1728 = vadd.f32 0.0, %v1727
        %1729 = vmatmul.f32.gmra.mxu0 %v1614
        %v1730 = vpop.f32.mrf.mxu0
        %v1731 = vadd.f32 0.0, %v1730
        %1732 = vmatmul.f32.gmra.mxu0 %v1617
        %v1733 = vpop.f32.mrf.mxu0
        %v1734 = vadd.f32 0.0, %v1733
        %1735 = vmatmul.f32.gmra.mxu0 %v1620
        %v1736 = vpop.f32.mrf.mxu0
        %v1737 = vadd.f32 0.0, %v1736
        %1738 = vmatmul.f32.gmra.mxu0 %v1623
        %v1739 = vpop.f32.mrf.mxu0
        %v1740 = vadd.f32 0.0, %v1739
        %1741 = vmatmul.f32.gmra.mxu0 %v1626
        %v1742 = vpop.f32.mrf.mxu0
        %v1743 = vadd.f32 0.0, %v1742
        %1744 = vmatmul.f32.gmra.mxu0 %v1629
        %v1745 = vpop.f32.mrf.mxu0
        %v1746 = vadd.f32 0.0, %v1745
        %1747 = vmatmul.f32.gmra.mxu0 %v1632
        %v1748 = vpop.f32.mrf.mxu0
        %v1749 = vadd.f32 0.0, %v1748
        %1750 = vmatmul.f32.gmra.mxu0 %v1635
        %v1751 = vpop.f32.mrf.mxu0
        %v1752 = vadd.f32 0.0, %v1751
        %1753 = vdwg.mxu0
        %1754 = vst [vmem:[%s196] sm:$0xff] %v1659
        %1755 = vst [vmem:[%s196 + $0x8] sm:$0xff] %v1662
        %1756 = vst [vmem:[%s196 + $0x10] sm:$0xff] %v1665
        %1757 = vst [vmem:[%s196 + $0x18] sm:$0xff] %v1668
        %1758 = vst [vmem:[%s196 + $0x20] sm:$0xff] %v1671
        %1759 = vst [vmem:[%s196 + $0x28] sm:$0xff] %v1674
        %1760 = vst [vmem:[%s196 + $0x30] sm:$0xff] %v1677
        %1761 = vst [vmem:[%s196 + $0x38] sm:$0xff] %v1680
        %1762 = vst [vmem:[%s196 + $0x40] sm:$0xff] %v1683
        %1763 = vst [vmem:[%s196 + $0x48] sm:$0xff] %v1686
        %1764 = vst [vmem:[%s196 + $0x50] sm:$0xff] %v1689
        %1765 = vst [vmem:[%s196 + $0x58] sm:$0xff] %v1692
        %1766 = vst [vmem:[%s196 + $0x60] sm:$0xff] %v1695
        %1767 = vst [vmem:[%s196 + $0x68] sm:$0xff] %v1698
        %1768 = vst [vmem:[%s196 + $0x70] sm:$0xff] %v1701
        %1769 = vst [vmem:[%s196 + $0x78] sm:$0xff] %v1704
        %1770 = vst [vmem:[%s196 + $0x80] sm:$0xff] %v1707
        %1771 = vst [vmem:[%s196 + $0x88] sm:$0xff] %v1710
        %1772 = vst [vmem:[%s196 + $0x90] sm:$0xff] %v1713
        %1773 = vst [vmem:[%s196 + $0x98] sm:$0xff] %v1716
        %1774 = vst [vmem:[%s196 + $0xa0] sm:$0xff] %v1719
        %1775 = vst [vmem:[%s196 + $0xa8] sm:$0xff] %v1722
        %1776 = vst [vmem:[%s196 + $0xb0] sm:$0xff] %v1725
        %1777 = vst [vmem:[%s196 + $0xb8] sm:$0xff] %v1728
        %1778 = vst [vmem:[%s196 + $0xc0] sm:$0xff] %v1731
        %1779 = vst [vmem:[%s196 + $0xc8] sm:$0xff] %v1734
        %1780 = vst [vmem:[%s196 + $0xd0] sm:$0xff] %v1737
        %1781 = vst [vmem:[%s196 + $0xd8] sm:$0xff] %v1740
        %1782 = vst [vmem:[%s196 + $0xe0] sm:$0xff] %v1743
        %1783 = vst [vmem:[%s196 + $0xe8] sm:$0xff] %v1746
        %1784 = vst [vmem:[%s196 + $0xf0] sm:$0xff] %v1749
        %1785 = vst [vmem:[%s196 + $0xf8] sm:$0xff] %v1752
        %v1786 = vadd.f32 %v1659, %v1662
        %v1787 = vadd.f32 %v1786, %v1665
        %v1788 = vadd.f32 %v1787, %v1668
        %v1789 = vadd.f32 %v1788, %v1671
        %v1790 = vadd.f32 %v1789, %v1674
        %v1791 = vadd.f32 %v1790, %v1677
        %v1792 = vadd.f32 %v1791, %v1680
        %v1793 = vadd.f32 %v1792, %v1683
        %v1794 = vadd.f32 %v1793, %v1686
        %v1795 = vadd.f32 %v1794, %v1689
        %v1796 = vadd.f32 %v1795, %v1692
        %v1797 = vadd.f32 %v1796, %v1695
        %v1798 = vadd.f32 %v1797, %v1698
        %v1799 = vadd.f32 %v1798, %v1701
        %v1800 = vadd.f32 %v1799, %v1704
        %v1801 = vadd.f32 %v1800, %v1707
        %v1802 = vadd.f32 %v1801, %v1710
        %v1803 = vadd.f32 %v1802, %v1713
        %v1804 = vadd.f32 %v1803, %v1716
        %v1805 = vadd.f32 %v1804, %v1719
        %v1806 = vadd.f32 %v1805, %v1722
        %v1807 = vadd.f32 %v1806, %v1725
        %v1808 = vadd.f32 %v1807, %v1728
        %v1809 = vadd.f32 %v1808, %v1731
        %v1810 = vadd.f32 %v1809, %v1734
        %v1811 = vadd.f32 %v1810, %v1737
        %v1812 = vadd.f32 %v1811, %v1740
        %v1813 = vadd.f32 %v1812, %v1743
        %v1814 = vadd.f32 %v1813, %v1746
        %v1815 = vadd.f32 %v1814, %v1749
        %v1816 = vadd.f32 %v1815, %v1752
        %v1817 = vrot.slane %v1816, 4
        %v1818 = vadd.f32 %v1816, %v1817
        %v1819 = vrot.slane %v1818, 2
        %v1820 = vadd.f32 %v1818, %v1819
        %v1821 = vrot.slane %v1820, 1
        %v1822 = vadd.f32 %v1820, %v1821
        %v1823 = vmul.f32 %v1659, %v1659
        %v1824 = vmul.f32 %v1662, %v1662
        %v1825 = vmul.f32 %v1665, %v1665
        %v1826 = vmul.f32 %v1668, %v1668
        %v1827 = vmul.f32 %v1671, %v1671
        %v1828 = vmul.f32 %v1674, %v1674
        %v1829 = vmul.f32 %v1677, %v1677
        %v1830 = vmul.f32 %v1680, %v1680
        %v1831 = vmul.f32 %v1683, %v1683
        %v1832 = vmul.f32 %v1686, %v1686
        %v1833 = vmul.f32 %v1689, %v1689
        %v1834 = vmul.f32 %v1692, %v1692
        %v1835 = vmul.f32 %v1695, %v1695
        %v1836 = vmul.f32 %v1698, %v1698
        %v1837 = vmul.f32 %v1701, %v1701
        %v1838 = vmul.f32 %v1704, %v1704
        %v1839 = vmul.f32 %v1707, %v1707
        %v1840 = vmul.f32 %v1710, %v1710
        %v1841 = vmul.f32 %v1713, %v1713
        %v1842 = vmul.f32 %v1716, %v1716
        %v1843 = vmul.f32 %v1719, %v1719
        %v1844 = vmul.f32 %v1722, %v1722
        %v1845 = vmul.f32 %v1725, %v1725
        %v1846 = vmul.f32 %v1728, %v1728
        %v1847 = vmul.f32 %v1731, %v1731
        %v1848 = vmul.f32 %v1734, %v1734
        %v1849 = vmul.f32 %v1737, %v1737
        %v1850 = vmul.f32 %v1740, %v1740
        %v1851 = vmul.f32 %v1743, %v1743
        %v1852 = vmul.f32 %v1746, %v1746
        %v1853 = vmul.f32 %v1749, %v1749
        %v1854 = vmul.f32 %v1752, %v1752
        %v1855 = vadd.f32 %v1823, %v1824
        %v1856 = vadd.f32 %v1855, %v1825
        %v1857 = vadd.f32 %v1856, %v1826
        %v1858 = vadd.f32 %v1857, %v1827
        %v1859 = vadd.f32 %v1858, %v1828
        %v1860 = vadd.f32 %v1859, %v1829
        %v1861 = vadd.f32 %v1860, %v1830
        %v1862 = vadd.f32 %v1861, %v1831
        %v1863 = vadd.f32 %v1862, %v1832
        %v1864 = vadd.f32 %v1863, %v1833
        %v1865 = vadd.f32 %v1864, %v1834
        %v1866 = vadd.f32 %v1865, %v1835
        %v1867 = vadd.f32 %v1866, %v1836
        %v1868 = vadd.f32 %v1867, %v1837
        %v1869 = vadd.f32 %v1868, %v1838
        %v1870 = vadd.f32 %v1869, %v1839
        %v1871 = vadd.f32 %v1870, %v1840
        %v1872 = vadd.f32 %v1871, %v1841
        %v1873 = vadd.f32 %v1872, %v1842
        %v1874 = vadd.f32 %v1873, %v1843
        %v1875 = vadd.f32 %v1874, %v1844
        %v1876 = vadd.f32 %v1875, %v1845
        %v1877 = vadd.f32 %v1876, %v1846
        %v1878 = vadd.f32 %v1877, %v1847
        %v1879 = vadd.f32 %v1878, %v1848
        %v1880 = vadd.f32 %v1879, %v1849
        %v1881 = vadd.f32 %v1880, %v1850
        %v1882 = vadd.f32 %v1881, %v1851
        %v1883 = vadd.f32 %v1882, %v1852
        %v1884 = vadd.f32 %v1883, %v1853
        %v1885 = vadd.f32 %v1884, %v1854
        %v1886 = vrot.slane %v1885, 4
        %v1887 = vadd.f32 %v1885, %v1886
        %v1888 = vrot.slane %v1887, 2
        %v1889 = vadd.f32 %v1887, %v1888
        %v1890 = vrot.slane %v1889, 1
        %v1891 = vadd.f32 %v1889, %v1890
        %vm1892 = vcmask 1040384
        %v1893 = vsel %vm1892, %v1822, %v1891
        %1894 = vst [vmem:[%s203] sm:$0x3] %v1893
        %s1895 = sand.u32 %s95, 1
        %s1896 = scalar_lea.sflag [#allocation3], %s1895
        %s1897 = sand.u32 %s95, 1
        %s1898 = smul.addr %s1897, 256
        %s1899 = scalar_lea.vmem [#allocation2], %s1898
        %s1900 = sand.u32 %s123, 1
        %s1901 = scalar_lea.sflag [#allocation5], %s1900
        %s1902 = sand.u32 %s123, 1
        %s1903 = smul.addr %s1902, 2
        %s1904 = scalar_lea.vmem [#allocation4], %s1903
        // Predicated region
        $region29: #{tpu_custom_call.1} parent=27 // pred_check
          %p1905 = pneg %p105
        $region30: #{tpu_custom_call.1} parent=27 // pred_check_branch
          %1907 = sbr.rel (%p1905) target = $region32
        $region31: #{tpu_custom_call.1} parent=27 // pred_region
          %1909 = vsyncadd %s1896, 0
          %s1910 = smul.addr %s25, 32
          %s1911 = sadd.s32 %s26, %s1910
          %s1912 = smul.addr %s1911, 8
          %s1913 = scalar_lea.hbm %s2, %s1912
          %s1914 = sshll.u32 %s1899, 4
          %s1915 = int_to_ptr.vmem [resolvable:$true] %s1914
          %s1916 = sshll.u32 %s1913, 4
          %s1917 = int_to_ptr.hbm [resolvable:$true] %s1916
          %1922 = dma.vmem_to_hbm [thread:$0]  %s1915, 4096, %s1917, %s1896, 128, 128, 8
        $region32: #{tpu_custom_call.1} parent=27 // pred_fallthru
          _
        // Predicated region
        $region33: #{tpu_custom_call.1} parent=27 // pred_check
          %p1923 = pneg %p133
        $region34: #{tpu_custom_call.1} parent=27 // pred_check_branch
          %1925 = sbr.rel (%p1923) target = $region36
        $region35: #{tpu_custom_call.1} parent=27 // pred_region
          %1927 = vsyncadd %s1901, 0
          %s1928 = sadd.s32 %s26, %s25
          %s1929 = smul.addr %s1928, 2
          %s1930 = scalar_lea.hbm %s3, %s1929
          %s1932 = sshll.u32 %s1904, 4
          %s1933 = int_to_ptr.vmem [resolvable:$true] %s1932
          %s1934 = sshll.u32 %s1930, 4
          %s1935 = int_to_ptr.hbm [resolvable:$true] %s1934
          %1937 = dma.vmem_to_hbm [thread:$0]  %s1933, 32, %s1935, %s1901
        $region36: #{tpu_custom_call.1} parent=27 // pred_fallthru
          _
      $region28: #{tpu_custom_call.1} parent=5 // pred_fallthru
        _
      %p1938 = scmp.le.s32.totalorder 2, %s16
      // Predicated region
      $region37: #{tpu_custom_call.1} parent=5 // pred_check
        %p1939 = pneg %p1938
      $region38: #{tpu_custom_call.1} parent=5 // pred_check_branch
        %1941 = sbr.rel (%p1939) target = $region40
      $region39: #{tpu_custom_call.1} parent=5 // pred_region
        %s1942 = ssub.s32 %s16, 2
        // Predicated region
        $region41: #{tpu_custom_call.1} parent=39 // pred_check
          %p1943 = pneg %p111
        $region42: #{tpu_custom_call.1} parent=39 // pred_check_branch
          %1945 = sbr.rel (%p1943) target = $region44
        $region43: #{tpu_custom_call.1} parent=39 // pred_region
          %s1946 = sand.u32 %s96, 1
          %s1947 = scalar_lea.sflag [#allocation3], %s1946
          %s1948 = sand.u32 %s96, 1
          %s1949 = smul.addr %s1948, 256
          %s1950 = scalar_lea.vmem [#allocation2], %s1949
          %1952 = dma.done %s1947, 4096
        $region44: #{tpu_custom_call.1} parent=39 // pred_fallthru
          _
        // Predicated region
        $region45: #{tpu_custom_call.1} parent=39 // pred_check
          %p1953 = pneg %p139
        $region46: #{tpu_custom_call.1} parent=39 // pred_check_branch
          %1955 = sbr.rel (%p1953) target = $region48
        $region47: #{tpu_custom_call.1} parent=39 // pred_region
          %s1956 = sand.u32 %s124, 1
          %s1957 = scalar_lea.sflag [#allocation5], %s1956
          %s1958 = sand.u32 %s124, 1
          %s1959 = smul.addr %s1958, 2
          %s1960 = scalar_lea.vmem [#allocation4], %s1959
          %1962 = dma.done %s1957, 32
        $region48: #{tpu_custom_call.1} parent=39 // pred_fallthru
          _
      $region40: #{tpu_custom_call.1} parent=5 // pred_fallthru
        _
    $region6: #{tpu_custom_call.1} parent=1 // loop_footer
      %s20 = sadd.s32 1, %s16
    $region7: #{tpu_custom_call.1} parent=1 // loop_footer_branch
      %15 = sbr.rel target = $region3
    $region8: #{tpu_custom_call.1} parent=1 // loop_exit
      _
    %1963 = vsyncpa [#allocation3], 1
    %s1964 = scalar_lea.sflag [#allocation3], 1
    %1965 = vsyncpa %s1964, 1
    %1966 = vsyncpa [#allocation5], 1
    %s1967 = scalar_lea.sflag [#allocation5], 1
    %1968 = vsyncpa %s1967, 1

</llo_original>
